<compile_context>
chip_gen: v5e
topology: v5e:2x2
jax: 0.10.0
libtpu: 0.0.40
codegen_flags: <defaults>
</compile_context>

<pallas_src>
import numpy as np
import jax
import jax.numpy as jnp
from jax.experimental import pallas as pl
from jax.experimental.pallas import tpu as pltpu

_EPS = 1e-5


# ----------------------------------------------------------------------------
# host-side constant builders
# ----------------------------------------------------------------------------
def _bilinear_matrix(out_size, in_size):
    """Interpolation matrix M (out x in) s.t. out = M @ in (align_corners=True)."""
    M = np.zeros((out_size, in_size), dtype=np.float32)
    if out_size == 1 or in_size == 1:
        M[:, 0] = 1.0
        return M
    scale = (in_size - 1) / (out_size - 1)
    for o in range(out_size):
        src = o * scale
        i0 = min(int(np.floor(src)), in_size - 1)
        frac = src - i0
        M[o, i0] += 1.0 - frac
        if frac > 0.0 and i0 + 1 < in_size:
            M[o, i0 + 1] += frac
    return M


def _upsample_mats(N, Hin, Win, C1, C2):
    """Matrices implementing the 2x bilinear upsample of x1 plus channel-concat
    placement as plain 2D matmuls landing in the (N*Hout, Wout*(C2+C1)) layout."""
    Hout, Wout = 2 * Hin, 2 * Win
    Cin0 = C1 + C2
    A = _bilinear_matrix(Hout, Hin)                    # (Hout, Hin)
    B = _bilinear_matrix(Wout, Win)                    # (Wout, Win)
    # block-diagonal height interpolation: rows (n, ho), cols (n, hi)
    Aexp = np.kron(np.eye(N, dtype=np.float32), A)     # (N*Hout, N*Hin)
    # width interpolation + placement of upsampled channels at slots [C2, C2+C1)
    Wexp = np.zeros((Win * C1, Wout * Cin0), np.float32)
    for wi in range(Win):
        for c in range(C1):
            for wo in range(Wout):
                Wexp[wi * C1 + c, wo * Cin0 + C2 + c] = B[wo, wi]
    # placement of x2 channels at slots [0, C2)   (torch.cat([x2, up], dim=1))
    Sexp = np.zeros((Wout * C2, Wout * Cin0), np.float32)
    for wo in range(Wout):
        for c in range(C2):
            Sexp[wo * C2 + c, wo * Cin0 + c] = 1.0
    return Aexp, Wexp, Sexp


def _rowshift_mats(N, Hout):
    """Constant (R, R) matrices picking the row above / below within each image
    (zero at the top/bottom border and across batch boundaries)."""
    R = N * Hout
    Sm = np.zeros((R, R), np.float32)   # (Sm @ x)[r] = x[r-1]   (dh = -1)
    Sp = np.zeros((R, R), np.float32)   # (Sp @ x)[r] = x[r+1]   (dh = +1)
    for r in range(R):
        h = r % Hout
        if h != 0:
            Sm[r, r - 1] = 1.0
        if h != Hout - 1:
            Sp[r, r + 1] = 1.0
    return Sm, Sp


def _pack_layer(layer, cin, v, Wout, R):
    """Per-layer kernel operands in the lane-dense layout."""
    w_dw, _b_dw, g1, b1, w_pw, _b_pw, g2, b2 = layer   # conv biases dropped (BN)
    L, L2 = Wout * cin, Wout * v
    # per-tap depthwise weights replicated across the Wout lane groups, with the
    # horizontal border zeroing folded in (dw=-1 taps invalid at w==0, dw=+1 at
    # w==Wout-1) so no masks/iota are needed inside the kernel.
    lane_w = np.arange(L) // cin
    mask9 = np.ones((9, L), np.float32)
    mask9[[0, 3, 6], :] = (lane_w > 0).astype(np.float32)
    mask9[[2, 5, 8], :] = (lane_w < Wout - 1).astype(np.float32)
    dw_lanes = jnp.tile(w_dw, (1, Wout)) * jnp.asarray(mask9)           # (9, L)
    g1_l = jnp.tile(g1, (1, Wout))                                      # (1, L)
    b1_l = jnp.tile(b1, (1, Wout))
    # averages each channel across the Wout lane groups and all R rows, then
    # re-broadcasts the per-channel value back to every lane of that channel.
    P1 = jnp.asarray(np.kron(np.ones((Wout, Wout), np.float32),
                             np.eye(cin, dtype=np.float32)) / (R * Wout))   # (L, L)
    # 1x1 conv as a block-diagonal lane-dense matmul weight
    Wpw = jnp.kron(jnp.eye(Wout, dtype=jnp.float32), w_pw)              # (L, L2)
    g2_l = jnp.tile(g2, (1, Wout))
    b2_l = jnp.tile(b2, (1, Wout))
    P2 = jnp.asarray(np.kron(np.ones((Wout, Wout), np.float32),
                             np.eye(v, dtype=np.float32)) / (R * Wout))     # (L2, L2)
    return [dw_lanes, g1_l, b1_l, P1, Wpw, g2_l, b2_l, P2]


# ----------------------------------------------------------------------------
# kernel
# ----------------------------------------------------------------------------
def make_up_light_kernel(cfg, N, Hout, Wout, Cin0):
    R = N * Hout

    def kernel(x1_ref, x2_ref, aexp_ref, wexp_ref, sexp_ref, sm_ref, sp_ref,
               *rest):
        out_ref = rest[-1]
        p = rest[:-1]

        # ---- bilinear upsample (align_corners=True) + channel concat:
        #      three plain 2D matmuls, result already lane-dense (R, Wout*Cin0)
        t = jnp.dot(aexp_ref[...], x1_ref[...],
                    preferred_element_type=jnp.float32)          # (R, Win*C1)
        x = (jnp.dot(t, wexp_ref[...], preferred_element_type=jnp.float32)
             + jnp.dot(x2_ref[...], sexp_ref[...],
                       preferred_element_type=jnp.float32))      # (R, Wout*Cin0)

        sm = sm_ref[...]
        sp = sp_ref[...]

        cin = Cin0
        idx = 0
        for v in cfg:
            L = Wout * cin
            dw_l = p[idx][...]        # (9, L)  tap weights (borders pre-zeroed)
            g1_l = p[idx + 1][...]    # (1, L)
            b1_l = p[idx + 2][...]    # (1, L)
            P1 = p[idx + 3][...]      # (L, L)
            wpw = p[idx + 4][...]     # (L, L2) block-diagonal 1x1 conv weight
            g2_l = p[idx + 5][...]    # (1, L2)
            b2_l = p[idx + 6][...]    # (1, L2)
            P2 = p[idx + 7][...]      # (L2, L2)
            idx += 8

            # ---- depthwise 3x3, pad=1 (bias cancelled by train-mode BN).
            # W neighbours: +-cin lanes via pltpu.roll (XLU); wrapped lanes are
            # killed by the pre-zeroed border tap weights.  H neighbours, zero
            # padding and batch boundaries live in the constant sm/sp matmuls.
            x_m = pltpu.roll(x, cin, axis=1)        # x[r, l - cin]  (w-1 source)
            x_p = pltpu.roll(x, L - cin, axis=1)    # x[r, l + cin]  (w+1 source)

            def row_taps(k0, xm=x_m, xc=x, xp=x_p, w=dw_l):
                return (xm * w[k0:k0 + 1] + xc * w[k0 + 1:k0 + 2]
                        + xp * w[k0 + 2:k0 + 3])

            acc = (jnp.dot(sm, row_taps(0), preferred_element_type=jnp.float32)
                   + row_taps(3)
                   + jnp.dot(sp, row_taps(6), preferred_element_type=jnp.float32))

            # ---- BN1 (train mode, biased variance) + ReLU: single pass
            # sum/sumsq (f32), folded into one per-element FMA.  P1 does the
            # cross-lane-group channel average + re-broadcast as a tiny matmul.
            s1 = jnp.sum(acc, axis=0, keepdims=True)              # (1, L)
            q1 = jnp.sum(acc * acc, axis=0, keepdims=True)
            mu = jnp.dot(s1, P1, preferred_element_type=jnp.float32)
            var = jnp.maximum(
                jnp.dot(q1, P1, preferred_element_type=jnp.float32) - mu * mu, 0.0)
            scale = g1_l * jax.lax.rsqrt(var + _EPS)
            h = jnp.maximum(acc * scale + (b1_l - mu * scale), 0.0)

            # ---- 1x1 conv (bias cancelled by BN2): one lane-dense matmul
            y = jnp.dot(h, wpw, preferred_element_type=jnp.float32)   # (R, L2)

            # ---- BN2 + ReLU
            s2 = jnp.sum(y, axis=0, keepdims=True)
            q2 = jnp.sum(y * y, axis=0, keepdims=True)
            mu2 = jnp.dot(s2, P2, preferred_element_type=jnp.float32)
            var2 = jnp.maximum(
                jnp.dot(q2, P2, preferred_element_type=jnp.float32) - mu2 * mu2, 0.0)
            scale2 = g2_l * jax.lax.rsqrt(var2 + _EPS)
            x = jnp.maximum(y * scale2 + (b2_l - mu2 * scale2), 0.0)
            cin = v

        out_ref[...] = x          # lane-dense (R, Wout*cfg[-1]) store

    return kernel


# ----------------------------------------------------------------------------
# wrapper
# ----------------------------------------------------------------------------
def up_light_forward(x1_nchw, x2_nchw, params, cfg):
    """x1/x2 in PyTorch NCHW; returns NCHW. All compute runs in one Pallas kernel."""
    N, C1, Hin, Win = x1_nchw.shape
    N2, C2, Hout, Wout = x2_nchw.shape
    assert N2 == N and Hout == 2 * Hin and Wout == 2 * Win
    Cin0 = C1 + C2
    R = N * Hout
    Cout = cfg[-1]

    # lane-dense host-side layouts: rows = (n, y), lanes = (x, c)
    # TODO(synk): at production scale fold these NCHW -> lane-dense relayouts
    #             into the producing op / kernel BlockSpecs (extra HBM pass).
    x1d = jnp.transpose(x1_nchw, (0, 2, 3, 1)).reshape(N * Hin, Win * C1)
    x1d = x1d.astype(jnp.float32)
    x2d = jnp.transpose(x2_nchw, (0, 2, 3, 1)).reshape(R, Wout * C2)
    x2d = x2d.astype(jnp.float32)

    Aexp, Wexp, Sexp = _upsample_mats(N, Hin, Win, C1, C2)
    Sm, Sp = _rowshift_mats(N, Hout)

    flat = []
    cin = Cin0
    for layer, v in zip(params, cfg):
        flat += _pack_layer(layer, cin, v, Wout, R)
        cin = v

    all_ins = [x1d, x2d, jnp.asarray(Aexp), jnp.asarray(Wexp), jnp.asarray(Sexp),
               jnp.asarray(Sm), jnp.asarray(Sp)] + flat
    n_in = len(all_ins)

    # advisory cost estimate + VMEM sizing
    flops = (2 * R * (N * Hin) * (Win * C1)
             + 2 * R * (Win * C1) * (Wout * Cin0)
             + 2 * R * (Wout * C2) * (Wout * Cin0))
    trans = 0
    cin = Cin0
    for v in cfg:
        L, L2 = Wout * cin, Wout * v
        flops += 18 * R * L + 4 * R * R * L           # taps + row-shift matmuls
        flops += 8 * R * L + 4 * L * L                # BN1
        flops += 2 * R * L * L2                       # 1x1 conv
        flops += 8 * R * L2 + 4 * L2 * L2             # BN2
        trans += L + L2
        cin = v
    bytes_acc = 4 * (sum(int(a.size) for a in all_ins) + R * Wout * Cout)
    vmem_limit = int(min(64 * 1024 * 1024, max(16 * 1024 * 1024, 8 * bytes_acc)))

    kernel = make_up_light_kernel(tuple(cfg), N, Hout, Wout, Cin0)
    out2d = pl.pallas_call(
        kernel,
        out_shape=jax.ShapeDtypeStruct((R, Wout * Cout), jnp.float32),
        in_specs=[pl.BlockSpec(memory_space=pltpu.MemorySpace.VMEM)] * n_in,
        out_specs=pl.BlockSpec(memory_space=pltpu.MemorySpace.VMEM),
        compiler_params=pltpu.CompilerParams(vmem_limit_bytes=vmem_limit),
        cost_estimate=pl.CostEstimate(flops=int(flops), transcendentals=int(trans),
                                      bytes_accessed=int(bytes_acc)),
    )(*all_ins)

    out = out2d.reshape(N, Hout, Wout, Cout)
    return jnp.transpose(out, (0, 3, 1, 2))


# ----------------------------------------------------------------------------
# parameters + pure-JAX reference
# ----------------------------------------------------------------------------
def init_params(key, cfg, in_channels):
    """Deterministic params matching Up_Light._initialize_weights shapes/dists."""
    params = []
    cin = in_channels
    for v in cfg:
        key, k1, k2 = jax.random.split(key, 3)
        # depthwise conv: torch weight (cin, 1, 3, 3), kaiming_normal fan_out
        std_dw = float(np.sqrt(2.0 / (cin * 9)))
        w_dw = jax.random.normal(k1, (cin, 1, 3, 3), jnp.float32) * std_dw
        w_dw = jnp.transpose(w_dw.reshape(cin, 9), (1, 0))           # -> (9, cin)
        b_dw = jnp.zeros((1, cin), jnp.float32)
        g1 = jnp.ones((1, cin), jnp.float32)
        b1 = jnp.zeros((1, cin), jnp.float32)
        # pointwise conv: torch weight (v, cin, 1, 1), kaiming_normal fan_out
        std_pw = float(np.sqrt(2.0 / v))
        w_pw = jax.random.normal(k2, (v, cin), jnp.float32) * std_pw
        w_pw = jnp.transpose(w_pw, (1, 0))                           # -> (cin, v)
        b_pw = jnp.zeros((1, v), jnp.float32)
        g2 = jnp.ones((1, v), jnp.float32)
        b2 = jnp.zeros((1, v), jnp.float32)
        params.append([w_dw, b_dw, g1, b1, w_pw, b_pw, g2, b2])
        cin = v
    return params


def reference(x1_nchw, x2_nchw, params, cfg):
    """Plain-JAX reference of the same forward semantics (for validation)."""
    N, C1, Hin, Win = x1_nchw.shape
    Hout, Wout = 2 * Hin, 2 * Win
    A = jnp.asarray(_bilinear_matrix(Hout, Hin))
    B = jnp.asarray(_bilinear_matrix(Wout, Win))
    x1 = jnp.transpose(x1_nchw, (0, 2, 3, 1)).astype(jnp.float32)
    x2 = jnp.transpose(x2_nchw, (0, 2, 3, 1)).astype(jnp.float32)
    up = jnp.einsum('oh,nhwc->nowc', A, x1)
    up = jnp.einsum('pw,nowc->nopc', B, up)
    x = jnp.concatenate([x2, up], axis=-1)
    for layer, v in zip(params, cfg):
        w_dw, b_dw, g1, b1, w_pw, b_pw, g2, b2 = layer
        xp = jnp.pad(x, ((0, 0), (1, 1), (1, 1), (0, 0)))
        acc = jnp.zeros_like(x) + b_dw
        for dh in range(3):
            for dwc in range(3):
                acc = acc + xp[:, dh:dh + Hout, dwc:dwc + Wout, :] * w_dw[dh * 3 + dwc]
        mu = jnp.mean(acc, axis=(0, 1, 2), keepdims=True)
        var = jnp.mean((acc - mu) ** 2, axis=(0, 1, 2), keepdims=True)
        h = jnp.maximum((acc - mu) * g1 / jnp.sqrt(var + _EPS) + b1, 0.0)
        y = jnp.einsum('nhwc,cv->nhwv', h, w_pw) + b_pw
        mu2 = jnp.mean(y, axis=(0, 1, 2), keepdims=True)
        var2 = jnp.mean((y - mu2) ** 2, axis=(0, 1, 2), keepdims=True)
        x = jnp.maximum((y - mu2) * g2 / jnp.sqrt(var2 + _EPS) + b2, 0.0)
    return jnp.transpose(x, (0, 3, 1, 2))


if __name__ == "__main__":
    cfg = [8, 16]                      # Up_Light(cfg=[8, 16], in_channels=8)
    key = jax.random.PRNGKey(0)
    key, kx1, kx2, kp = jax.random.split(key, 4)

    # x1: coarse feature map (NCHW), x2: skip connection at 2x resolution
    x1 = jax.random.normal(kx1, (2, 4, 8, 8), jnp.float32)
    x2 = jax.random.normal(kx2, (2, 4, 16, 16), jnp.float32)
    in_channels = x1.shape[1] + x2.shape[1]            # 8, matches module contract
    params = init_params(kp, cfg, in_channels)

    out = up_light_forward(x1, x2, params, cfg)
    out = jax.block_until_ready(out)

    ref = reference(x1, x2, params, cfg)
    assert out.shape == (2, cfg[-1], 16, 16), out.shape
    assert bool(jnp.all(jnp.isfinite(out)))
    assert bool(jnp.allclose(out, ref, rtol=1e-3, atol=1e-3))
    print("KERNEL_OK")
</pallas_src>

<mosaic_0001>
module attributes {stable_mosaic.version = 11 : i64} {
  func.func @kernel(%arg0: memref<16x32xf32, #tpu.memory_space<vmem>>, %arg1: memref<32x64xf32, #tpu.memory_space<vmem>>, %arg2: memref<32x16xf32, #tpu.memory_space<vmem>>, %arg3: memref<32x128xf32, #tpu.memory_space<vmem>>, %arg4: memref<64x128xf32, #tpu.memory_space<vmem>>, %arg5: memref<32x32xf32, #tpu.memory_space<vmem>>, %arg6: memref<32x32xf32, #tpu.memory_space<vmem>>, %arg7: memref<9x128xf32, #tpu.memory_space<vmem>>, %arg8: memref<1x128xf32, #tpu.memory_space<vmem>>, %arg9: memref<1x128xf32, #tpu.memory_space<vmem>>, %arg10: memref<128x128xf32, #tpu.memory_space<vmem>>, %arg11: memref<128x128xf32, #tpu.memory_space<vmem>>, %arg12: memref<1x128xf32, #tpu.memory_space<vmem>>, %arg13: memref<1x128xf32, #tpu.memory_space<vmem>>, %arg14: memref<128x128xf32, #tpu.memory_space<vmem>>, %arg15: memref<9x128xf32, #tpu.memory_space<vmem>>, %arg16: memref<1x128xf32, #tpu.memory_space<vmem>>, %arg17: memref<1x128xf32, #tpu.memory_space<vmem>>, %arg18: memref<128x128xf32, #tpu.memory_space<vmem>>, %arg19: memref<128x256xf32, #tpu.memory_space<vmem>>, %arg20: memref<1x256xf32, #tpu.memory_space<vmem>>, %arg21: memref<1x256xf32, #tpu.memory_space<vmem>>, %arg22: memref<256x256xf32, #tpu.memory_space<vmem>>, %arg23: memref<32x256xf32, #tpu.memory_space<vmem>>) attributes {dimension_semantics = [], scalar_prefetch = 0 : i64, scratch_operands = 0 : i64, tpu.core_type = #tpu.core_type<tc>} {
    %c0 = arith.constant 0 : index
    %c0_0 = arith.constant 0 : index
    %0 = vector.load %arg2[%c0, %c0_0] : memref<32x16xf32, #tpu.memory_space<vmem>>, vector<32x16xf32>
    %c0_1 = arith.constant 0 : index
    %c0_2 = arith.constant 0 : index
    %1 = vector.load %arg0[%c0_1, %c0_2] : memref<16x32xf32, #tpu.memory_space<vmem>>, vector<16x32xf32>
    %cst = arith.constant dense<0.000000e+00> : vector<32x32xf32>
    %2 = tpu.matmul %0, %1, %cst {dimension_numbers = #tpu.dot_dimension_numbers<[1], [0], [0], [1], [0, 0, 1, 1], [], []>} : vector<32x16xf32>, vector<16x32xf32>, vector<32x32xf32> -> vector<32x32xf32>
    %c0_3 = arith.constant 0 : index
    %c0_4 = arith.constant 0 : index
    %3 = vector.load %arg3[%c0_3, %c0_4] : memref<32x128xf32, #tpu.memory_space<vmem>>, vector<32x128xf32>
    %cst_5 = arith.constant dense<0.000000e+00> : vector<32x128xf32>
    %4 = tpu.matmul %2, %3, %cst_5 {dimension_numbers = #tpu.dot_dimension_numbers<[1], [0], [0], [1], [0, 0, 1, 1], [], []>} : vector<32x32xf32>, vector<32x128xf32>, vector<32x128xf32> -> vector<32x128xf32>
    %c0_6 = arith.constant 0 : index
    %c0_7 = arith.constant 0 : index
    %5 = vector.load %arg1[%c0_6, %c0_7] : memref<32x64xf32, #tpu.memory_space<vmem>>, vector<32x64xf32>
    %c0_8 = arith.constant 0 : index
    %c0_9 = arith.constant 0 : index
    %6 = vector.load %arg4[%c0_8, %c0_9] : memref<64x128xf32, #tpu.memory_space<vmem>>, vector<64x128xf32>
    %cst_10 = arith.constant dense<0.000000e+00> : vector<32x128xf32>
    %7 = tpu.matmul %5, %6, %cst_10 {dimension_numbers = #tpu.dot_dimension_numbers<[1], [0], [0], [1], [0, 0, 1, 1], [], []>} : vector<32x64xf32>, vector<64x128xf32>, vector<32x128xf32> -> vector<32x128xf32>
    %8 = arith.addf %4, %7 : vector<32x128xf32>
    %c0_11 = arith.constant 0 : index
    %c0_12 = arith.constant 0 : index
    %9 = vector.load %arg5[%c0_11, %c0_12] : memref<32x32xf32, #tpu.memory_space<vmem>>, vector<32x32xf32>
    %c0_13 = arith.constant 0 : index
    %c0_14 = arith.constant 0 : index
    %10 = vector.load %arg6[%c0_13, %c0_14] : memref<32x32xf32, #tpu.memory_space<vmem>>, vector<32x32xf32>
    %c0_15 = arith.constant 0 : index
    %c0_16 = arith.constant 0 : index
    %11 = vector.load %arg7[%c0_15, %c0_16] : memref<9x128xf32, #tpu.memory_space<vmem>>, vector<9x128xf32>
    %c0_17 = arith.constant 0 : index
    %c0_18 = arith.constant 0 : index
    %12 = vector.load %arg8[%c0_17, %c0_18] : memref<1x128xf32, #tpu.memory_space<vmem>>, vector<1x128xf32>
    %c0_19 = arith.constant 0 : index
    %c0_20 = arith.constant 0 : index
    %13 = vector.load %arg9[%c0_19, %c0_20] : memref<1x128xf32, #tpu.memory_space<vmem>>, vector<1x128xf32>
    %c0_21 = arith.constant 0 : index
    %c0_22 = arith.constant 0 : index
    %14 = vector.load %arg10[%c0_21, %c0_22] : memref<128x128xf32, #tpu.memory_space<vmem>>, vector<128x128xf32>
    %c0_23 = arith.constant 0 : index
    %c0_24 = arith.constant 0 : index
    %15 = vector.load %arg11[%c0_23, %c0_24] : memref<128x128xf32, #tpu.memory_space<vmem>>, vector<128x128xf32>
    %c0_25 = arith.constant 0 : index
    %c0_26 = arith.constant 0 : index
    %16 = vector.load %arg12[%c0_25, %c0_26] : memref<1x128xf32, #tpu.memory_space<vmem>>, vector<1x128xf32>
    %c0_27 = arith.constant 0 : index
    %c0_28 = arith.constant 0 : index
    %17 = vector.load %arg13[%c0_27, %c0_28] : memref<1x128xf32, #tpu.memory_space<vmem>>, vector<1x128xf32>
    %c0_29 = arith.constant 0 : index
    %c0_30 = arith.constant 0 : index
    %18 = vector.load %arg14[%c0_29, %c0_30] : memref<128x128xf32, #tpu.memory_space<vmem>>, vector<128x128xf32>
    %c8_i32 = arith.constant 8 : i32
    %19 = tpu.dynamic_rotate %8 by %c8_i32 dim 1 : vector<32x128xf32>, i32 -> vector<32x128xf32>
    %c120_i32 = arith.constant 120 : i32
    %20 = tpu.dynamic_rotate %8 by %c120_i32 dim 1 : vector<32x128xf32>, i32 -> vector<32x128xf32>
    %21 = vector.extract_strided_slice %11 {offsets = [0, 0], sizes = [1, 128], strides = [1, 1]} : vector<9x128xf32> to vector<1x128xf32>
    %22 = vector.broadcast %21 : vector<1x128xf32> to vector<32x128xf32>
    %23 = arith.mulf %19, %22 : vector<32x128xf32>
    %24 = vector.extract_strided_slice %11 {offsets = [1, 0], sizes = [1, 128], strides = [1, 1]} : vector<9x128xf32> to vector<1x128xf32>
    %25 = vector.broadcast %24 : vector<1x128xf32> to vector<32x128xf32>
    %26 = arith.mulf %8, %25 : vector<32x128xf32>
    %27 = arith.addf %23, %26 : vector<32x128xf32>
    %28 = vector.extract_strided_slice %11 {offsets = [2, 0], sizes = [1, 128], strides = [1, 1]} : vector<9x128xf32> to vector<1x128xf32>
    %29 = vector.broadcast %28 : vector<1x128xf32> to vector<32x128xf32>
    %30 = arith.mulf %20, %29 : vector<32x128xf32>
    %31 = arith.addf %27, %30 : vector<32x128xf32>
    %cst_31 = arith.constant dense<0.000000e+00> : vector<32x128xf32>
    %32 = tpu.matmul %9, %31, %cst_31 {dimension_numbers = #tpu.dot_dimension_numbers<[1], [0], [0], [1], [0, 0, 1, 1], [], []>} : vector<32x32xf32>, vector<32x128xf32>, vector<32x128xf32> -> vector<32x128xf32>
    %33 = vector.extract_strided_slice %11 {offsets = [3, 0], sizes = [1, 128], strides = [1, 1]} : vector<9x128xf32> to vector<1x128xf32>
    %34 = vector.broadcast %33 : vector<1x128xf32> to vector<32x128xf32>
    %35 = arith.mulf %19, %34 : vector<32x128xf32>
    %36 = vector.extract_strided_slice %11 {offsets = [4, 0], sizes = [1, 128], strides = [1, 1]} : vector<9x128xf32> to vector<1x128xf32>
    %37 = vector.broadcast %36 : vector<1x128xf32> to vector<32x128xf32>
    %38 = arith.mulf %8, %37 : vector<32x128xf32>
    %39 = arith.addf %35, %38 : vector<32x128xf32>
    %40 = vector.extract_strided_slice %11 {offsets = [5, 0], sizes = [1, 128], strides = [1, 1]} : vector<9x128xf32> to vector<1x128xf32>
    %41 = vector.broadcast %40 : vector<1x128xf32> to vector<32x128xf32>
    %42 = arith.mulf %20, %41 : vector<32x128xf32>
    %43 = arith.addf %39, %42 : vector<32x128xf32>
    %44 = arith.addf %32, %43 : vector<32x128xf32>
    %45 = vector.extract_strided_slice %11 {offsets = [6, 0], sizes = [1, 128], strides = [1, 1]} : vector<9x128xf32> to vector<1x128xf32>
    %46 = vector.broadcast %45 : vector<1x128xf32> to vector<32x128xf32>
    %47 = arith.mulf %19, %46 : vector<32x128xf32>
    %48 = vector.extract_strided_slice %11 {offsets = [7, 0], sizes = [1, 128], strides = [1, 1]} : vector<9x128xf32> to vector<1x128xf32>
    %49 = vector.broadcast %48 : vector<1x128xf32> to vector<32x128xf32>
    %50 = arith.mulf %8, %49 : vector<32x128xf32>
    %51 = arith.addf %47, %50 : vector<32x128xf32>
    %52 = vector.extract_strided_slice %11 {offsets = [8, 0], sizes = [1, 128], strides = [1, 1]} : vector<9x128xf32> to vector<1x128xf32>
    %53 = vector.broadcast %52 : vector<1x128xf32> to vector<32x128xf32>
    %54 = arith.mulf %20, %53 : vector<32x128xf32>
    %55 = arith.addf %51, %54 : vector<32x128xf32>
    %cst_32 = arith.constant dense<0.000000e+00> : vector<32x128xf32>
    %56 = tpu.matmul %10, %55, %cst_32 {dimension_numbers = #tpu.dot_dimension_numbers<[1], [0], [0], [1], [0, 0, 1, 1], [], []>} : vector<32x32xf32>, vector<32x128xf32>, vector<32x128xf32> -> vector<32x128xf32>
    %57 = arith.addf %44, %56 : vector<32x128xf32>
    %cst_33 = arith.constant dense<0.000000e+00> : vector<128xf32>
    %58 = vector.multi_reduction <add>, %57, %cst_33 [0] : vector<32x128xf32> to vector<128xf32>
    %59 = vector.shape_cast %58 : vector<128xf32> to vector<1x128xf32>
    %60 = arith.mulf %57, %57 : vector<32x128xf32>
    %cst_34 = arith.constant dense<0.000000e+00> : vector<128xf32>
    %61 = vector.multi_reduction <add>, %60, %cst_34 [0] : vector<32x128xf32> to vector<128xf32>
    %62 = vector.shape_cast %61 : vector<128xf32> to vector<1x128xf32>
    %cst_35 = arith.constant dense<0.000000e+00> : vector<1x128xf32>
    %63 = tpu.matmul %59, %14, %cst_35 {dimension_numbers = #tpu.dot_dimension_numbers<[1], [0], [0], [1], [0, 0, 1, 1], [], []>} : vector<1x128xf32>, vector<128x128xf32>, vector<1x128xf32> -> vector<1x128xf32>
    %cst_36 = arith.constant dense<0.000000e+00> : vector<1x128xf32>
    %64 = tpu.matmul %62, %14, %cst_36 {dimension_numbers = #tpu.dot_dimension_numbers<[1], [0], [0], [1], [0, 0, 1, 1], [], []>} : vector<1x128xf32>, vector<128x128xf32>, vector<1x128xf32> -> vector<1x128xf32>
    %65 = arith.mulf %63, %63 : vector<1x128xf32>
    %66 = arith.subf %64, %65 : vector<1x128xf32>
    %cst_37 = arith.constant 0.000000e+00 : f32
    %67 = vector.broadcast %cst_37 : f32 to vector<1x128xf32>
    %68 = arith.maximumf %66, %67 : vector<1x128xf32>
    %cst_38 = arith.constant 9.99999974E-6 : f32
    %69 = vector.broadcast %cst_38 : f32 to vector<1x128xf32>
    %70 = arith.addf %68, %69 : vector<1x128xf32>
    %71 = math.rsqrt %70 : vector<1x128xf32>
    %72 = arith.mulf %12, %71 : vector<1x128xf32>
    %73 = vector.broadcast %72 : vector<1x128xf32> to vector<32x128xf32>
    %74 = arith.mulf %57, %73 : vector<32x128xf32>
    %75 = arith.mulf %63, %72 : vector<1x128xf32>
    %76 = arith.subf %13, %75 : vector<1x128xf32>
    %77 = vector.broadcast %76 : vector<1x128xf32> to vector<32x128xf32>
    %78 = arith.addf %74, %77 : vector<32x128xf32>
    %cst_39 = arith.constant 0.000000e+00 : f32
    %79 = vector.broadcast %cst_39 : f32 to vector<32x128xf32>
    %80 = arith.maximumf %78, %79 : vector<32x128xf32>
    %cst_40 = arith.constant dense<0.000000e+00> : vector<32x128xf32>
    %81 = tpu.matmul %80, %15, %cst_40 {dimension_numbers = #tpu.dot_dimension_numbers<[1], [0], [0], [1], [0, 0, 1, 1], [], []>} : vector<32x128xf32>, vector<128x128xf32>, vector<32x128xf32> -> vector<32x128xf32>
    %cst_41 = arith.constant dense<0.000000e+00> : vector<128xf32>
    %82 = vector.multi_reduction <add>, %81, %cst_41 [0] : vector<32x128xf32> to vector<128xf32>
    %83 = vector.shape_cast %82 : vector<128xf32> to vector<1x128xf32>
    %84 = arith.mulf %81, %81 : vector<32x128xf32>
    %cst_42 = arith.constant dense<0.000000e+00> : vector<128xf32>
    %85 = vector.multi_reduction <add>, %84, %cst_42 [0] : vector<32x128xf32> to vector<128xf32>
    %86 = vector.shape_cast %85 : vector<128xf32> to vector<1x128xf32>
    %cst_43 = arith.constant dense<0.000000e+00> : vector<1x128xf32>
    %87 = tpu.matmul %83, %18, %cst_43 {dimension_numbers = #tpu.dot_dimension_numbers<[1], [0], [0], [1], [0, 0, 1, 1], [], []>} : vector<1x128xf32>, vector<128x128xf32>, vector<1x128xf32> -> vector<1x128xf32>
    %cst_44 = arith.constant dense<0.000000e+00> : vector<1x128xf32>
    %88 = tpu.matmul %86, %18, %cst_44 {dimension_numbers = #tpu.dot_dimension_numbers<[1], [0], [0], [1], [0, 0, 1, 1], [], []>} : vector<1x128xf32>, vector<128x128xf32>, vector<1x128xf32> -> vector<1x128xf32>
    %89 = arith.mulf %87, %87 : vector<1x128xf32>
    %90 = arith.subf %88, %89 : vector<1x128xf32>
    %cst_45 = arith.constant 0.000000e+00 : f32
    %91 = vector.broadcast %cst_45 : f32 to vector<1x128xf32>
    %92 = arith.maximumf %90, %91 : vector<1x128xf32>
    %cst_46 = arith.constant 9.99999974E-6 : f32
    %93 = vector.broadcast %cst_46 : f32 to vector<1x128xf32>
    %94 = arith.addf %92, %93 : vector<1x128xf32>
    %95 = math.rsqrt %94 : vector<1x128xf32>
    %96 = arith.mulf %16, %95 : vector<1x128xf32>
    %97 = vector.broadcast %96 : vector<1x128xf32> to vector<32x128xf32>
    %98 = arith.mulf %81, %97 : vector<32x128xf32>
    %99 = arith.mulf %87, %96 : vector<1x128xf32>
    %100 = arith.subf %17, %99 : vector<1x128xf32>
    %101 = vector.broadcast %100 : vector<1x128xf32> to vector<32x128xf32>
    %102 = arith.addf %98, %101 : vector<32x128xf32>
    %cst_47 = arith.constant 0.000000e+00 : f32
    %103 = vector.broadcast %cst_47 : f32 to vector<32x128xf32>
    %104 = arith.maximumf %102, %103 : vector<32x128xf32>
    %c0_48 = arith.constant 0 : index
    %c0_49 = arith.constant 0 : index
    %105 = vector.load %arg15[%c0_48, %c0_49] : memref<9x128xf32, #tpu.memory_space<vmem>>, vector<9x128xf32>
    %c0_50 = arith.constant 0 : index
    %c0_51 = arith.constant 0 : index
    %106 = vector.load %arg16[%c0_50, %c0_51] : memref<1x128xf32, #tpu.memory_space<vmem>>, vector<1x128xf32>
    %c0_52 = arith.constant 0 : index
    %c0_53 = arith.constant 0 : index
    %107 = vector.load %arg17[%c0_52, %c0_53] : memref<1x128xf32, #tpu.memory_space<vmem>>, vector<1x128xf32>
    %c0_54 = arith.constant 0 : index
    %c0_55 = arith.constant 0 : index
    %108 = vector.load %arg18[%c0_54, %c0_55] : memref<128x128xf32, #tpu.memory_space<vmem>>, vector<128x128xf32>
    %c0_56 = arith.constant 0 : index
    %c0_57 = arith.constant 0 : index
    %109 = vector.load %arg19[%c0_56, %c0_57] : memref<128x256xf32, #tpu.memory_space<vmem>>, vector<128x256xf32>
    %c0_58 = arith.constant 0 : index
    %c0_59 = arith.constant 0 : index
    %110 = vector.load %arg20[%c0_58, %c0_59] : memref<1x256xf32, #tpu.memory_space<vmem>>, vector<1x256xf32>
    %c0_60 = arith.constant 0 : index
    %c0_61 = arith.constant 0 : index
    %111 = vector.load %arg21[%c0_60, %c0_61] : memref<1x256xf32, #tpu.memory_space<vmem>>, vector<1x256xf32>
    %c0_62 = arith.constant 0 : index
    %c0_63 = arith.constant 0 : index
    %112 = vector.load %arg22[%c0_62, %c0_63] : memref<256x256xf32, #tpu.memory_space<vmem>>, vector<256x256xf32>
    %c8_i32_64 = arith.constant 8 : i32
    %113 = tpu.dynamic_rotate %104 by %c8_i32_64 dim 1 : vector<32x128xf32>, i32 -> vector<32x128xf32>
    %c120_i32_65 = arith.constant 120 : i32
    %114 = tpu.dynamic_rotate %104 by %c120_i32_65 dim 1 : vector<32x128xf32>, i32 -> vector<32x128xf32>
    %115 = vector.extract_strided_slice %105 {offsets = [0, 0], sizes = [1, 128], strides = [1, 1]} : vector<9x128xf32> to vector<1x128xf32>
    %116 = vector.broadcast %115 : vector<1x128xf32> to vector<32x128xf32>
    %117 = arith.mulf %113, %116 : vector<32x128xf32>
    %118 = vector.extract_strided_slice %105 {offsets = [1, 0], sizes = [1, 128], strides = [1, 1]} : vector<9x128xf32> to vector<1x128xf32>
    %119 = vector.broadcast %118 : vector<1x128xf32> to vector<32x128xf32>
    %120 = arith.mulf %104, %119 : vector<32x128xf32>
    %121 = arith.addf %117, %120 : vector<32x128xf32>
    %122 = vector.extract_strided_slice %105 {offsets = [2, 0], sizes = [1, 128], strides = [1, 1]} : vector<9x128xf32> to vector<1x128xf32>
    %123 = vector.broadcast %122 : vector<1x128xf32> to vector<32x128xf32>
    %124 = arith.mulf %114, %123 : vector<32x128xf32>
    %125 = arith.addf %121, %124 : vector<32x128xf32>
    %cst_66 = arith.constant dense<0.000000e+00> : vector<32x128xf32>
    %126 = tpu.matmul %9, %125, %cst_66 {dimension_numbers = #tpu.dot_dimension_numbers<[1], [0], [0], [1], [0, 0, 1, 1], [], []>} : vector<32x32xf32>, vector<32x128xf32>, vector<32x128xf32> -> vector<32x128xf32>
    %127 = vector.extract_strided_slice %105 {offsets = [3, 0], sizes = [1, 128], strides = [1, 1]} : vector<9x128xf32> to vector<1x128xf32>
    %128 = vector.broadcast %127 : vector<1x128xf32> to vector<32x128xf32>
    %129 = arith.mulf %113, %128 : vector<32x128xf32>
    %130 = vector.extract_strided_slice %105 {offsets = [4, 0], sizes = [1, 128], strides = [1, 1]} : vector<9x128xf32> to vector<1x128xf32>
    %131 = vector.broadcast %130 : vector<1x128xf32> to vector<32x128xf32>
    %132 = arith.mulf %104, %131 : vector<32x128xf32>
    %133 = arith.addf %129, %132 : vector<32x128xf32>
    %134 = vector.extract_strided_slice %105 {offsets = [5, 0], sizes = [1, 128], strides = [1, 1]} : vector<9x128xf32> to vector<1x128xf32>
    %135 = vector.broadcast %134 : vector<1x128xf32> to vector<32x128xf32>
    %136 = arith.mulf %114, %135 : vector<32x128xf32>
    %137 = arith.addf %133, %136 : vector<32x128xf32>
    %138 = arith.addf %126, %137 : vector<32x128xf32>
    %139 = vector.extract_strided_slice %105 {offsets = [6, 0], sizes = [1, 128], strides = [1, 1]} : vector<9x128xf32> to vector<1x128xf32>
    %140 = vector.broadcast %139 : vector<1x128xf32> to vector<32x128xf32>
    %141 = arith.mulf %113, %140 : vector<32x128xf32>
    %142 = vector.extract_strided_slice %105 {offsets = [7, 0], sizes = [1, 128], strides = [1, 1]} : vector<9x128xf32> to vector<1x128xf32>
    %143 = vector.broadcast %142 : vector<1x128xf32> to vector<32x128xf32>
    %144 = arith.mulf %104, %143 : vector<32x128xf32>
    %145 = arith.addf %141, %144 : vector<32x128xf32>
    %146 = vector.extract_strided_slice %105 {offsets = [8, 0], sizes = [1, 128], strides = [1, 1]} : vector<9x128xf32> to vector<1x128xf32>
    %147 = vector.broadcast %146 : vector<1x128xf32> to vector<32x128xf32>
    %148 = arith.mulf %114, %147 : vector<32x128xf32>
    %149 = arith.addf %145, %148 : vector<32x128xf32>
    %cst_67 = arith.constant dense<0.000000e+00> : vector<32x128xf32>
    %150 = tpu.matmul %10, %149, %cst_67 {dimension_numbers = #tpu.dot_dimension_numbers<[1], [0], [0], [1], [0, 0, 1, 1], [], []>} : vector<32x32xf32>, vector<32x128xf32>, vector<32x128xf32> -> vector<32x128xf32>
    %151 = arith.addf %138, %150 : vector<32x128xf32>
    %cst_68 = arith.constant dense<0.000000e+00> : vector<128xf32>
    %152 = vector.multi_reduction <add>, %151, %cst_68 [0] : vector<32x128xf32> to vector<128xf32>
    %153 = vector.shape_cast %152 : vector<128xf32> to vector<1x128xf32>
    %154 = arith.mulf %151, %151 : vector<32x128xf32>
    %cst_69 = arith.constant dense<0.000000e+00> : vector<128xf32>
    %155 = vector.multi_reduction <add>, %154, %cst_69 [0] : vector<32x128xf32> to vector<128xf32>
    %156 = vector.shape_cast %155 : vector<128xf32> to vector<1x128xf32>
    %cst_70 = arith.constant dense<0.000000e+00> : vector<1x128xf32>
    %157 = tpu.matmul %153, %108, %cst_70 {dimension_numbers = #tpu.dot_dimension_numbers<[1], [0], [0], [1], [0, 0, 1, 1], [], []>} : vector<1x128xf32>, vector<128x128xf32>, vector<1x128xf32> -> vector<1x128xf32>
    %cst_71 = arith.constant dense<0.000000e+00> : vector<1x128xf32>
    %158 = tpu.matmul %156, %108, %cst_71 {dimension_numbers = #tpu.dot_dimension_numbers<[1], [0], [0], [1], [0, 0, 1, 1], [], []>} : vector<1x128xf32>, vector<128x128xf32>, vector<1x128xf32> -> vector<1x128xf32>
    %159 = arith.mulf %157, %157 : vector<1x128xf32>
    %160 = arith.subf %158, %159 : vector<1x128xf32>
    %cst_72 = arith.constant 0.000000e+00 : f32
    %161 = vector.broadcast %cst_72 : f32 to vector<1x128xf32>
    %162 = arith.maximumf %160, %161 : vector<1x128xf32>
    %cst_73 = arith.constant 9.99999974E-6 : f32
    %163 = vector.broadcast %cst_73 : f32 to vector<1x128xf32>
    %164 = arith.addf %162, %163 : vector<1x128xf32>
    %165 = math.rsqrt %164 : vector<1x128xf32>
    %166 = arith.mulf %106, %165 : vector<1x128xf32>
    %167 = vector.broadcast %166 : vector<1x128xf32> to vector<32x128xf32>
    %168 = arith.mulf %151, %167 : vector<32x128xf32>
    %169 = arith.mulf %157, %166 : vector<1x128xf32>
    %170 = arith.subf %107, %169 : vector<1x128xf32>
    %171 = vector.broadcast %170 : vector<1x128xf32> to vector<32x128xf32>
    %172 = arith.addf %168, %171 : vector<32x128xf32>
    %cst_74 = arith.constant 0.000000e+00 : f32
    %173 = vector.broadcast %cst_74 : f32 to vector<32x128xf32>
    %174 = arith.maximumf %172, %173 : vector<32x128xf32>
    %cst_75 = arith.constant dense<0.000000e+00> : vector<32x256xf32>
    %175 = tpu.matmul %174, %109, %cst_75 {dimension_numbers = #tpu.dot_dimension_numbers<[1], [0], [0], [1], [0, 0, 1, 1], [], []>} : vector<32x128xf32>, vector<128x256xf32>, vector<32x256xf32> -> vector<32x256xf32>
    %cst_76 = arith.constant dense<0.000000e+00> : vector<256xf32>
    %176 = vector.multi_reduction <add>, %175, %cst_76 [0] : vector<32x256xf32> to vector<256xf32>
    %177 = vector.shape_cast %176 : vector<256xf32> to vector<1x256xf32>
    %178 = arith.mulf %175, %175 : vector<32x256xf32>
    %cst_77 = arith.constant dense<0.000000e+00> : vector<256xf32>
    %179 = vector.multi_reduction <add>, %178, %cst_77 [0] : vector<32x256xf32> to vector<256xf32>
    %180 = vector.shape_cast %179 : vector<256xf32> to vector<1x256xf32>
    %cst_78 = arith.constant dense<0.000000e+00> : vector<1x256xf32>
    %181 = tpu.matmul %177, %112, %cst_78 {dimension_numbers = #tpu.dot_dimension_numbers<[1], [0], [0], [1], [0, 0, 1, 1], [], []>} : vector<1x256xf32>, vector<256x256xf32>, vector<1x256xf32> -> vector<1x256xf32>
    %cst_79 = arith.constant dense<0.000000e+00> : vector<1x256xf32>
    %182 = tpu.matmul %180, %112, %cst_79 {dimension_numbers = #tpu.dot_dimension_numbers<[1], [0], [0], [1], [0, 0, 1, 1], [], []>} : vector<1x256xf32>, vector<256x256xf32>, vector<1x256xf32> -> vector<1x256xf32>
    %183 = arith.mulf %181, %181 : vector<1x256xf32>
    %184 = arith.subf %182, %183 : vector<1x256xf32>
    %cst_80 = arith.constant 0.000000e+00 : f32
    %185 = vector.broadcast %cst_80 : f32 to vector<1x256xf32>
    %186 = arith.maximumf %184, %185 : vector<1x256xf32>
    %cst_81 = arith.constant 9.99999974E-6 : f32
    %187 = vector.broadcast %cst_81 : f32 to vector<1x256xf32>
    %188 = arith.addf %186, %187 : vector<1x256xf32>
    %189 = math.rsqrt %188 : vector<1x256xf32>
    %190 = arith.mulf %110, %189 : vector<1x256xf32>
    %191 = vector.broadcast %190 : vector<1x256xf32> to vector<32x256xf32>
    %192 = arith.mulf %175, %191 : vector<32x256xf32>
    %193 = arith.mulf %181, %190 : vector<1x256xf32>
    %194 = arith.subf %111, %193 : vector<1x256xf32>
    %195 = vector.broadcast %194 : vector<1x256xf32> to vector<32x256xf32>
    %196 = arith.addf %192, %195 : vector<32x256xf32>
    %cst_82 = arith.constant 0.000000e+00 : f32
    %197 = vector.broadcast %cst_82 : f32 to vector<32x256xf32>
    %198 = arith.maximumf %196, %197 : vector<32x256xf32>
    %c0_83 = arith.constant 0 : index
    %c0_84 = arith.constant 0 : index
    %199 = vector.load %arg23[%c0_83, %c0_84] : memref<32x256xf32, #tpu.memory_space<vmem>>, vector<32x256xf32>
    tpu.vector_store %arg23[%c0_83, %c0_84], %198 {strides = array<i32>} : memref<32x256xf32, #tpu.memory_space<vmem>>, vector<32x256xf32>,
    return
  }
}

</mosaic_0001>

<llo_original>
// kernel: tpu_custom_call.1
$region0: #{tpu_custom_call.1}
  #allocation0 [shape = 'u32[]', space=smem, size = 0x4, offset = 0x4, fixed_abs, tag = 'smem constant byte address 0x4 - core index']
  #allocation1 [shape = 'u32[72,128]{1,0:T(1,128)}', space=vmem, size = 0x9000, scoped, tag = 'internal scratch']
  %s0 = inlined_call_operand.vmem [shape: f32[16,32], index: 0, kind: input, shape index: {}]
  %s1 = inlined_call_operand.vmem [shape: f32[32,64], index: 1, kind: input, shape index: {}]
  %s2 = inlined_call_operand.vmem [shape: f32[32,16], index: 2, kind: input, shape index: {}]
  %s3 = inlined_call_operand.hbm [shape: f32[32,128], index: 3, kind: input, shape index: {}]
  %s4 = inlined_call_operand.hbm [shape: f32[64,128], index: 4, kind: input, shape index: {}]
  %s5 = inlined_call_operand.hbm [shape: f32[32,32], index: 5, kind: input, shape index: {}]
  %s6 = inlined_call_operand.hbm [shape: f32[32,32], index: 6, kind: input, shape index: {}]
  %s7 = inlined_call_operand.hbm [shape: f32[9,128], index: 7, kind: input, shape index: {}]
  %s8 = inlined_call_operand.vmem [shape: f32[1,128], index: 8, kind: input, shape index: {}]
  %s9 = inlined_call_operand.vmem [shape: f32[1,128], index: 9, kind: input, shape index: {}]
  %s10 = inlined_call_operand.hbm [shape: f32[128,128], index: 10, kind: input, shape index: {}]
  %s11 = inlined_call_operand.hbm [shape: f32[128,128], index: 11, kind: input, shape index: {}]
  %s12 = inlined_call_operand.vmem [shape: f32[1,128], index: 12, kind: input, shape index: {}]
  %s13 = inlined_call_operand.vmem [shape: f32[1,128], index: 13, kind: input, shape index: {}]
  %s14 = inlined_call_operand.hbm [shape: f32[128,128], index: 14, kind: input, shape index: {}]
  %s15 = inlined_call_operand.hbm [shape: f32[9,128], index: 15, kind: input, shape index: {}]
  %s16 = inlined_call_operand.vmem [shape: f32[1,128], index: 16, kind: input, shape index: {}]
  %s17 = inlined_call_operand.vmem [shape: f32[1,128], index: 17, kind: input, shape index: {}]
  %s18 = inlined_call_operand.hbm [shape: f32[128,128], index: 18, kind: input, shape index: {}]
  %s19 = inlined_call_operand.hbm [shape: f32[128,256], index: 19, kind: input, shape index: {}]
  %s20 = inlined_call_operand.vmem [shape: f32[1,256], index: 20, kind: input, shape index: {}]
  %s21 = inlined_call_operand.vmem [shape: f32[1,256], index: 21, kind: input, shape index: {}]
  %s22 = inlined_call_operand.hbm [shape: f32[256,256], index: 22, kind: input, shape index: {}]
  %s23 = inlined_call_operand.hbm [shape: f32[32,256], index: 23, kind: output, shape index: {}]
  %s24 = sld [smem:[#allocation0]]
  $region150: #{tpu_custom_call.1} parent=0
    _
  %s26 = ssub.s32 1, %s24
  %s27 = scalar_select 0, %s26, %s24
  $region1: #{tpu_custom_call.1} parent=0
    #allocation2 [shape = 'u8[16384]{0}', space=vmem, size = 0x4000, scoped, tag = 'input window, operand 3, single buffered']
    #allocation3 [shape = 's32[1]{0}', space=sflag, size = 0x4, scoped, tag = 'scoped memory for tpu_custom_call.1']
    #allocation4 [shape = 's32[1]{0}', space=sflag, size = 0x4, scoped, tag = 'scoped memory for tpu_custom_call.1']
    #allocation5 [shape = 'u8[32768]{0}', space=vmem, size = 0x8000, scoped, tag = 'input window, operand 4, single buffered']
    #allocation6 [shape = 's32[1]{0}', space=sflag, size = 0x4, scoped, tag = 'scoped memory for tpu_custom_call.1']
    #allocation7 [shape = 'u8[16384]{0}', space=vmem, size = 0x4000, scoped, tag = 'input window, operand 5, single buffered']
    #allocation8 [shape = 'u8[16384]{0}', space=vmem, size = 0x4000, scoped, tag = 'input window, operand 6, single buffered']
    #allocation9 [shape = 's32[1]{0}', space=sflag, size = 0x4, scoped, tag = 'scoped memory for tpu_custom_call.1']
    #allocation10 [shape = 'u8[8192]{0}', space=vmem, size = 0x2000, scoped, tag = 'input window, operand 7, single buffered']
    #allocation11 [shape = 'u8[65536]{0}', space=vmem, size = 0x10000, scoped, tag = 'input window, operand 10, single buffered']
    #allocation12 [shape = 's32[1]{0}', space=sflag, size = 0x4, scoped, tag = 'scoped memory for tpu_custom_call.1']
    #allocation13 [shape = 'u8[65536]{0}', space=vmem, size = 0x10000, scoped, tag = 'input window, operand 11, single buffered']
    #allocation14 [shape = 'u8[65536]{0}', space=vmem, size = 0x10000, scoped, tag = 'input window, operand 14, single buffered']
    #allocation15 [shape = 's32[1]{0}', space=sflag, size = 0x4, scoped, tag = 'scoped memory for tpu_custom_call.1']
    #allocation16 [shape = 'u8[8192]{0}', space=vmem, size = 0x2000, scoped, tag = 'input window, operand 15, single buffered']
    #allocation17 [shape = 'u8[65536]{0}', space=vmem, size = 0x10000, scoped, tag = 'input window, operand 18, single buffered']
    #allocation18 [shape = 's32[1]{0}', space=sflag, size = 0x4, scoped, tag = 'scoped memory for tpu_custom_call.1']
    #allocation19 [shape = 'u8[131072]{0}', space=vmem, size = 0x20000, scoped, tag = 'input window, operand 19, single buffered']
    #allocation20 [shape = 'u8[262144]{0}', space=vmem, size = 0x40000, scoped, tag = 'input window, operand 22, single buffered']
    #allocation21 [shape = 's32[1]{0}', space=sflag, size = 0x4, scoped, tag = 'scoped memory for tpu_custom_call.1']
    #allocation22 [shape = 'u8[32768]{0}', space=vmem, size = 0x8000, scoped, tag = 'output window, operand 0, single buffered']
    %28 = vsyncpa [#allocation3], 0
    %29 = vsyncpa [#allocation6], 0
    %30 = vsyncpa [#allocation9], 0
    %31 = vsyncpa [#allocation12], 0
    %32 = vsyncpa [#allocation15], 0
    %33 = vsyncpa [#allocation18], 0
    %34 = vsyncpa [#allocation21], 0
    %35 = vsyncpa [#allocation4], 0
    // Predicated region
    $region2: #{tpu_custom_call.1} parent=1 // pred_check
      _
    $region3: #{tpu_custom_call.1} parent=1 // pred_check_branch
      %37 = sbr.rel (0) target = $region5
    $region4: #{tpu_custom_call.1} parent=1 // pred_region
      _
    $region5: #{tpu_custom_call.1} parent=1 // pred_fallthru
      _
    // Predicated region
    $region6: #{tpu_custom_call.1} parent=1 // pred_check
      _
    $region7: #{tpu_custom_call.1} parent=1 // pred_check_branch
      %39 = sbr.rel (0) target = $region9
    $region8: #{tpu_custom_call.1} parent=1 // pred_region
      _
    $region9: #{tpu_custom_call.1} parent=1 // pred_fallthru
      _
    // Predicated region
    $region10: #{tpu_custom_call.1} parent=1 // pred_check
      _
    $region11: #{tpu_custom_call.1} parent=1 // pred_check_branch
      %41 = sbr.rel (0) target = $region13
    $region12: #{tpu_custom_call.1} parent=1 // pred_region
      _
    $region13: #{tpu_custom_call.1} parent=1 // pred_fallthru
      _
    // Predicated region
    $region14: #{tpu_custom_call.1} parent=1 // pred_check
      _
    $region15: #{tpu_custom_call.1} parent=1 // pred_check_branch
      %43 = sbr.rel (0) target = $region17
    $region16: #{tpu_custom_call.1} parent=1 // pred_region
      %45 = vsyncadd [#allocation3], 0
      %s46 = sshll.u32 %s3, 4
      %s47 = int_to_ptr.hbm [resolvable:$true] %s46
      %s48 = sshll.u32 [#allocation2], 4
      %s49 = int_to_ptr.vmem [resolvable:$true] %s48
      %54 = dma.hbm_to_vmem [thread:$0]  %s47, 512, %s49, [#allocation3], 128, 128, 8
    $region17: #{tpu_custom_call.1} parent=1 // pred_fallthru
      _
    // Predicated region
    $region18: #{tpu_custom_call.1} parent=1 // pred_check
      _
    $region19: #{tpu_custom_call.1} parent=1 // pred_check_branch
      %56 = sbr.rel (0) target = $region21
    $region20: #{tpu_custom_call.1} parent=1 // pred_region
      %58 = vsyncadd [#allocation6], 0
      %s59 = sshll.u32 %s4, 4
      %s60 = int_to_ptr.hbm [resolvable:$true] %s59
      %s61 = sshll.u32 [#allocation5], 4
      %s62 = int_to_ptr.vmem [resolvable:$true] %s61
      %67 = dma.hbm_to_vmem [thread:$0]  %s60, 1024, %s62, [#allocation6], 128, 128, 8
    $region21: #{tpu_custom_call.1} parent=1 // pred_fallthru
      _
    // Predicated region
    $region22: #{tpu_custom_call.1} parent=1 // pred_check
      _
    $region23: #{tpu_custom_call.1} parent=1 // pred_check_branch
      %69 = sbr.rel (0) target = $region25
    $region24: #{tpu_custom_call.1} parent=1 // pred_region
      %71 = vsyncadd [#allocation6], 0
      %s72 = sshll.u32 %s5, 4
      %s73 = int_to_ptr.hbm [resolvable:$true] %s72
      %s74 = sshll.u32 [#allocation7], 4
      %s75 = int_to_ptr.vmem [resolvable:$true] %s74
      %80 = dma.hbm_to_vmem [thread:$0]  %s73, 512, %s75, [#allocation6], 128, 128, 8
    $region25: #{tpu_custom_call.1} parent=1 // pred_fallthru
      _
    // Predicated region
    $region26: #{tpu_custom_call.1} parent=1 // pred_check
      _
    $region27: #{tpu_custom_call.1} parent=1 // pred_check_branch
      %82 = sbr.rel (0) target = $region29
    $region28: #{tpu_custom_call.1} parent=1 // pred_region
      %84 = vsyncadd [#allocation9], 0
      %s85 = sshll.u32 %s6, 4
      %s86 = int_to_ptr.hbm [resolvable:$true] %s85
      %s87 = sshll.u32 [#allocation8], 4
      %s88 = int_to_ptr.vmem [resolvable:$true] %s87
      %93 = dma.hbm_to_vmem [thread:$0]  %s86, 512, %s88, [#allocation9], 128, 128, 8
    $region29: #{tpu_custom_call.1} parent=1 // pred_fallthru
      _
    // Predicated region
    $region30: #{tpu_custom_call.1} parent=1 // pred_check
      _
    $region31: #{tpu_custom_call.1} parent=1 // pred_check_branch
      %95 = sbr.rel (0) target = $region33
    $region32: #{tpu_custom_call.1} parent=1 // pred_region
      %97 = vsyncadd [#allocation9], 0
      %s98 = sshll.u32 %s7, 4
      %s99 = int_to_ptr.hbm [resolvable:$true] %s98
      %s100 = sshll.u32 [#allocation10], 4
      %s101 = int_to_ptr.vmem [resolvable:$true] %s100
      %106 = dma.hbm_to_vmem [thread:$0]  %s99, 256, %s101, [#allocation9], 128, 128, 8
    $region33: #{tpu_custom_call.1} parent=1 // pred_fallthru
      _
    // Predicated region
    $region34: #{tpu_custom_call.1} parent=1 // pred_check
      _
    $region35: #{tpu_custom_call.1} parent=1 // pred_check_branch
      %108 = sbr.rel (0) target = $region37
    $region36: #{tpu_custom_call.1} parent=1 // pred_region
      _
    $region37: #{tpu_custom_call.1} parent=1 // pred_fallthru
      _
    // Predicated region
    $region38: #{tpu_custom_call.1} parent=1 // pred_check
      _
    $region39: #{tpu_custom_call.1} parent=1 // pred_check_branch
      %110 = sbr.rel (0) target = $region41
    $region40: #{tpu_custom_call.1} parent=1 // pred_region
      _
    $region41: #{tpu_custom_call.1} parent=1 // pred_fallthru
      _
    // Predicated region
    $region42: #{tpu_custom_call.1} parent=1 // pred_check
      _
    $region43: #{tpu_custom_call.1} parent=1 // pred_check_branch
      %112 = sbr.rel (0) target = $region45
    $region44: #{tpu_custom_call.1} parent=1 // pred_region
      %114 = vsyncadd [#allocation12], 0
      %s115 = sshll.u32 %s10, 4
      %s116 = int_to_ptr.hbm [resolvable:$true] %s115
      %s117 = sshll.u32 [#allocation11], 4
      %s118 = int_to_ptr.vmem [resolvable:$true] %s117
      %123 = dma.hbm_to_vmem [thread:$0]  %s116, 2048, %s118, [#allocation12], 128, 128, 8
    $region45: #{tpu_custom_call.1} parent=1 // pred_fallthru
      _
    // Predicated region
    $region46: #{tpu_custom_call.1} parent=1 // pred_check
      _
    $region47: #{tpu_custom_call.1} parent=1 // pred_check_branch
      %125 = sbr.rel (0) target = $region49
    $region48: #{tpu_custom_call.1} parent=1 // pred_region
      %127 = vsyncadd [#allocation12], 0
      %s128 = sshll.u32 %s11, 4
      %s129 = int_to_ptr.hbm [resolvable:$true] %s128
      %s130 = sshll.u32 [#allocation13], 4
      %s131 = int_to_ptr.vmem [resolvable:$true] %s130
      %136 = dma.hbm_to_vmem [thread:$0]  %s129, 2048, %s131, [#allocation12], 128, 128, 8
    $region49: #{tpu_custom_call.1} parent=1 // pred_fallthru
      _
    // Predicated region
    $region50: #{tpu_custom_call.1} parent=1 // pred_check
      _
    $region51: #{tpu_custom_call.1} parent=1 // pred_check_branch
      %138 = sbr.rel (0) target = $region53
    $region52: #{tpu_custom_call.1} parent=1 // pred_region
      _
    $region53: #{tpu_custom_call.1} parent=1 // pred_fallthru
      _
    // Predicated region
    $region54: #{tpu_custom_call.1} parent=1 // pred_check
      _
    $region55: #{tpu_custom_call.1} parent=1 // pred_check_branch
      %140 = sbr.rel (0) target = $region57
    $region56: #{tpu_custom_call.1} parent=1 // pred_region
      _
    $region57: #{tpu_custom_call.1} parent=1 // pred_fallthru
      _
    // Predicated region
    $region58: #{tpu_custom_call.1} parent=1 // pred_check
      _
    $region59: #{tpu_custom_call.1} parent=1 // pred_check_branch
      %142 = sbr.rel (0) target = $region61
    $region60: #{tpu_custom_call.1} parent=1 // pred_region
      %144 = vsyncadd [#allocation15], 0
      %s145 = sshll.u32 %s14, 4
      %s146 = int_to_ptr.hbm [resolvable:$true] %s145
      %s147 = sshll.u32 [#allocation14], 4
      %s148 = int_to_ptr.vmem [resolvable:$true] %s147
      %153 = dma.hbm_to_vmem [thread:$0]  %s146, 2048, %s148, [#allocation15], 128, 128, 8
    $region61: #{tpu_custom_call.1} parent=1 // pred_fallthru
      _
    // Predicated region
    $region62: #{tpu_custom_call.1} parent=1 // pred_check
      _
    $region63: #{tpu_custom_call.1} parent=1 // pred_check_branch
      %155 = sbr.rel (0) target = $region65
    $region64: #{tpu_custom_call.1} parent=1 // pred_region
      %157 = vsyncadd [#allocation15], 0
      %s158 = sshll.u32 %s15, 4
      %s159 = int_to_ptr.hbm [resolvable:$true] %s158
      %s160 = sshll.u32 [#allocation16], 4
      %s161 = int_to_ptr.vmem [resolvable:$true] %s160
      %166 = dma.hbm_to_vmem [thread:$0]  %s159, 256, %s161, [#allocation15], 128, 128, 8
    $region65: #{tpu_custom_call.1} parent=1 // pred_fallthru
      _
    // Predicated region
    $region66: #{tpu_custom_call.1} parent=1 // pred_check
      _
    $region67: #{tpu_custom_call.1} parent=1 // pred_check_branch
      %168 = sbr.rel (0) target = $region69
    $region68: #{tpu_custom_call.1} parent=1 // pred_region
      _
    $region69: #{tpu_custom_call.1} parent=1 // pred_fallthru
      _
    // Predicated region
    $region70: #{tpu_custom_call.1} parent=1 // pred_check
      _
    $region71: #{tpu_custom_call.1} parent=1 // pred_check_branch
      %170 = sbr.rel (0) target = $region73
    $region72: #{tpu_custom_call.1} parent=1 // pred_region
      _
    $region73: #{tpu_custom_call.1} parent=1 // pred_fallthru
      _
    // Predicated region
    $region74: #{tpu_custom_call.1} parent=1 // pred_check
      _
    $region75: #{tpu_custom_call.1} parent=1 // pred_check_branch
      %172 = sbr.rel (0) target = $region77
    $region76: #{tpu_custom_call.1} parent=1 // pred_region
      %174 = vsyncadd [#allocation18], 0
      %s175 = sshll.u32 %s18, 4
      %s176 = int_to_ptr.hbm [resolvable:$true] %s175
      %s177 = sshll.u32 [#allocation17], 4
      %s178 = int_to_ptr.vmem [resolvable:$true] %s177
      %183 = dma.hbm_to_vmem [thread:$0]  %s176, 2048, %s178, [#allocation18], 128, 128, 8
    $region77: #{tpu_custom_call.1} parent=1 // pred_fallthru
      _
    // Predicated region
    $region78: #{tpu_custom_call.1} parent=1 // pred_check
      _
    $region79: #{tpu_custom_call.1} parent=1 // pred_check_branch
      %185 = sbr.rel (0) target = $region81
    $region80: #{tpu_custom_call.1} parent=1 // pred_region
      %187 = vsyncadd [#allocation18], 0
      %s188 = sshll.u32 %s19, 4
      %s189 = int_to_ptr.hbm [resolvable:$true] %s188
      %s190 = sshll.u32 [#allocation19], 4
      %s191 = int_to_ptr.vmem [resolvable:$true] %s190
      %196 = dma.hbm_to_vmem [thread:$0]  %s189, 4096, %s191, [#allocation18], 256, 256, 16
    $region81: #{tpu_custom_call.1} parent=1 // pred_fallthru
      _
    // Predicated region
    $region82: #{tpu_custom_call.1} parent=1 // pred_check
      _
    $region83: #{tpu_custom_call.1} parent=1 // pred_check_branch
      %198 = sbr.rel (0) target = $region85
    $region84: #{tpu_custom_call.1} parent=1 // pred_region
      _
    $region85: #{tpu_custom_call.1} parent=1 // pred_fallthru
      _
    // Predicated region
    $region86: #{tpu_custom_call.1} parent=1 // pred_check
      _
    $region87: #{tpu_custom_call.1} parent=1 // pred_check_branch
      %200 = sbr.rel (0) target = $region89
    $region88: #{tpu_custom_call.1} parent=1 // pred_region
      _
    $region89: #{tpu_custom_call.1} parent=1 // pred_fallthru
      _
    // Predicated region
    $region90: #{tpu_custom_call.1} parent=1 // pred_check
      _
    $region91: #{tpu_custom_call.1} parent=1 // pred_check_branch
      %202 = sbr.rel (0) target = $region93
    $region92: #{tpu_custom_call.1} parent=1 // pred_region
      %204 = vsyncadd [#allocation21], 0
      %s205 = sshll.u32 %s22, 4
      %s206 = int_to_ptr.hbm [resolvable:$true] %s205
      %s207 = sshll.u32 [#allocation20], 4
      %s208 = int_to_ptr.vmem [resolvable:$true] %s207
      %213 = dma.hbm_to_vmem [thread:$0]  %s206, 8192, %s208, [#allocation21], 256, 256, 16
    $region93: #{tpu_custom_call.1} parent=1 // pred_fallthru
      _
    // Predicated region
    $region94: #{tpu_custom_call.1} parent=1 // pred_check
      _
    $region95: #{tpu_custom_call.1} parent=1 // pred_check_branch
      %215 = sbr.rel (0) target = $region97
    $region96: #{tpu_custom_call.1} parent=1 // pred_region
      %217 = dma.done [#allocation3], 512
    $region97: #{tpu_custom_call.1} parent=1 // pred_fallthru
      _
    // Predicated region
    $region98: #{tpu_custom_call.1} parent=1 // pred_check
      _
    $region99: #{tpu_custom_call.1} parent=1 // pred_check_branch
      %219 = sbr.rel (0) target = $region101
    $region100: #{tpu_custom_call.1} parent=1 // pred_region
      %221 = dma.done [#allocation6], 1024
    $region101: #{tpu_custom_call.1} parent=1 // pred_fallthru
      _
    // Predicated region
    $region102: #{tpu_custom_call.1} parent=1 // pred_check
      _
    $region103: #{tpu_custom_call.1} parent=1 // pred_check_branch
      %223 = sbr.rel (0) target = $region105
    $region104: #{tpu_custom_call.1} parent=1 // pred_region
      %225 = dma.done [#allocation6], 512
    $region105: #{tpu_custom_call.1} parent=1 // pred_fallthru
      _
    // Predicated region
    $region106: #{tpu_custom_call.1} parent=1 // pred_check
      _
    $region107: #{tpu_custom_call.1} parent=1 // pred_check_branch
      %227 = sbr.rel (0) target = $region109
    $region108: #{tpu_custom_call.1} parent=1 // pred_region
      %229 = dma.done [#allocation9], 512
    $region109: #{tpu_custom_call.1} parent=1 // pred_fallthru
      _
    // Predicated region
    $region110: #{tpu_custom_call.1} parent=1 // pred_check
      _
    $region111: #{tpu_custom_call.1} parent=1 // pred_check_branch
      %231 = sbr.rel (0) target = $region113
    $region112: #{tpu_custom_call.1} parent=1 // pred_region
      %233 = dma.done [#allocation9], 256
    $region113: #{tpu_custom_call.1} parent=1 // pred_fallthru
      _
    // Predicated region
    $region114: #{tpu_custom_call.1} parent=1 // pred_check
      _
    $region115: #{tpu_custom_call.1} parent=1 // pred_check_branch
      %235 = sbr.rel (0) target = $region117
    $region116: #{tpu_custom_call.1} parent=1 // pred_region
      %237 = dma.done [#allocation12], 2048
    $region117: #{tpu_custom_call.1} parent=1 // pred_fallthru
      _
    // Predicated region
    $region118: #{tpu_custom_call.1} parent=1 // pred_check
      _
    $region119: #{tpu_custom_call.1} parent=1 // pred_check_branch
      %239 = sbr.rel (0) target = $region121
    $region120: #{tpu_custom_call.1} parent=1 // pred_region
      %241 = dma.done [#allocation12], 2048
    $region121: #{tpu_custom_call.1} parent=1 // pred_fallthru
      _
    // Predicated region
    $region122: #{tpu_custom_call.1} parent=1 // pred_check
      _
    $region123: #{tpu_custom_call.1} parent=1 // pred_check_branch
      %243 = sbr.rel (0) target = $region125
    $region124: #{tpu_custom_call.1} parent=1 // pred_region
      %245 = dma.done [#allocation15], 2048
    $region125: #{tpu_custom_call.1} parent=1 // pred_fallthru
      _
    // Predicated region
    $region126: #{tpu_custom_call.1} parent=1 // pred_check
      _
    $region127: #{tpu_custom_call.1} parent=1 // pred_check_branch
      %247 = sbr.rel (0) target = $region129
    $region128: #{tpu_custom_call.1} parent=1 // pred_region
      %249 = dma.done [#allocation15], 256
    $region129: #{tpu_custom_call.1} parent=1 // pred_fallthru
      _
    // Predicated region
    $region130: #{tpu_custom_call.1} parent=1 // pred_check
      _
    $region131: #{tpu_custom_call.1} parent=1 // pred_check_branch
      %251 = sbr.rel (0) target = $region133
    $region132: #{tpu_custom_call.1} parent=1 // pred_region
      %253 = dma.done [#allocation18], 2048
    $region133: #{tpu_custom_call.1} parent=1 // pred_fallthru
      _
    // Predicated region
    $region134: #{tpu_custom_call.1} parent=1 // pred_check
      _
    $region135: #{tpu_custom_call.1} parent=1 // pred_check_branch
      %255 = sbr.rel (0) target = $region137
    $region136: #{tpu_custom_call.1} parent=1 // pred_region
      %257 = dma.done [#allocation18], 4096
    $region137: #{tpu_custom_call.1} parent=1 // pred_fallthru
      _
    // Predicated region
    $region138: #{tpu_custom_call.1} parent=1 // pred_check
      _
    $region139: #{tpu_custom_call.1} parent=1 // pred_check_branch
      %259 = sbr.rel (0) target = $region141
    $region140: #{tpu_custom_call.1} parent=1 // pred_region
      %261 = dma.done [#allocation21], 8192
    $region141: #{tpu_custom_call.1} parent=1 // pred_fallthru
      _
    %v262 = vld [vmem:[%s2] sm:$0xff]
    %v263 = vld [vmem:[%s2 + $0x8] sm:$0xff]
    %v264 = vld [vmem:[%s2 + $0x10] sm:$0xff]
    %v265 = vld [vmem:[%s2 + $0x18] sm:$0xff]
    %v266 = vld [vmem:[%s0] sm:$0xff]
    %v267 = vld [vmem:[%s0 + $0x8] sm:$0xff]
    %vm268 = vcmask 130048
    %v270 = vsel %vm268, %v262, 0
    %v273 = vsel %vm268, %v263, 0
    %v276 = vsel %vm268, %v264, 0
    %v279 = vsel %vm268, %v265, 0
    %281 = vmatpush.msra.mxu0 0.0
    %282 = vmatpush.msra.mxu0 0.0
    %283 = vmatpush.msra.mxu0 0.0
    %284 = vmatpush.msra.mxu0 0.0
    %285 = vmatpush.msra.mxu0 0.0
    %286 = vmatpush.msra.mxu0 0.0
    %287 = vmatpush.msra.mxu0 0.0
    %288 = vmatpush.msra.mxu0 0.0
    %289 = vmatpush.msra.mxu0 0.0
    %290 = vmatpush.msra.mxu0 0.0
    %291 = vmatpush.msra.mxu0 0.0
    %292 = vmatpush.msra.mxu0 0.0
    %293 = vmatpush.msra.mxu0 0.0
    %294 = vmatpush.msra.mxu0 0.0
    %295 = vmatpush.msra.mxu0 %v267
    %296 = vmatpush.msra.mxu0 %v266
    %297 = vmatmul.f32.gmra.mxu0 %v270
    %v298 = vpop.f32.mrf.mxu0
    %v299 = vadd.f32 0.0, %v298
    %300 = vmatmul.f32.gmra.mxu0 %v273
    %v301 = vpop.f32.mrf.mxu0
    %v302 = vadd.f32 0.0, %v301
    %303 = vmatmul.f32.gmra.mxu0 %v276
    %v304 = vpop.f32.mrf.mxu0
    %v305 = vadd.f32 0.0, %v304
    %306 = vmatmul.f32.gmra.mxu0 %v279
    %v307 = vpop.f32.mrf.mxu0
    %v308 = vadd.f32 0.0, %v307
    %309 = vdwg.mxu0
    %v310 = vld [vmem:[#allocation2] sm:$0xff]
    %v311 = vld [vmem:[#allocation2 + $0x8] sm:$0xff]
    %v312 = vld [vmem:[#allocation2 + $0x10] sm:$0xff]
    %v313 = vld [vmem:[#allocation2 + $0x18] sm:$0xff]
    %v314 = vld [vmem:[%s1] sm:$0xff]
    %v315 = vld [vmem:[%s1 + $0x8] sm:$0xff]
    %v316 = vld [vmem:[%s1 + $0x10] sm:$0xff]
    %v317 = vld [vmem:[%s1 + $0x18] sm:$0xff]
    %v318 = vld [vmem:[#allocation5] sm:$0xff]
    %v319 = vld [vmem:[#allocation5 + $0x8] sm:$0xff]
    %v320 = vld [vmem:[#allocation5 + $0x10] sm:$0xff]
    %v321 = vld [vmem:[#allocation5 + $0x18] sm:$0xff]
    %v322 = vld [vmem:[#allocation5 + $0x20] sm:$0xff]
    %v323 = vld [vmem:[#allocation5 + $0x28] sm:$0xff]
    %v324 = vld [vmem:[#allocation5 + $0x30] sm:$0xff]
    %v325 = vld [vmem:[#allocation5 + $0x38] sm:$0xff]
    %vm326 = vcmask 523264
    %v328 = vsel %vm326, %v314, 0
    %v331 = vsel %vm326, %v315, 0
    %v334 = vsel %vm326, %v316, 0
    %v337 = vsel %vm326, %v317, 0
    %339 = vmatpush.msra.mxu0 0.0
    %340 = vmatpush.msra.mxu0 0.0
    %341 = vmatpush.msra.mxu0 0.0
    %342 = vmatpush.msra.mxu0 0.0
    %343 = vmatpush.msra.mxu0 0.0
    %344 = vmatpush.msra.mxu0 0.0
    %345 = vmatpush.msra.mxu0 0.0
    %346 = vmatpush.msra.mxu0 0.0
    %347 = vmatpush.msra.mxu0 %v325
    %348 = vmatpush.msra.mxu0 %v324
    %349 = vmatpush.msra.mxu0 %v323
    %350 = vmatpush.msra.mxu0 %v322
    %351 = vmatpush.msra.mxu0 %v321
    %352 = vmatpush.msra.mxu0 %v320
    %353 = vmatpush.msra.mxu0 %v319
    %354 = vmatpush.msra.mxu0 %v318
    %355 = vmatmul.f32.gmra.mxu0 %v328
    %v356 = vpop.f32.mrf.mxu0
    %v357 = vadd.f32 0.0, %v356
    %358 = vmatmul.f32.gmra.mxu0 %v331
    %v359 = vpop.f32.mrf.mxu0
    %v360 = vadd.f32 0.0, %v359
    %361 = vmatmul.f32.gmra.mxu0 %v334
    %v362 = vpop.f32.mrf.mxu0
    %v363 = vadd.f32 0.0, %v362
    %364 = vmatmul.f32.gmra.mxu0 %v337
    %v365 = vpop.f32.mrf.mxu0
    %v366 = vadd.f32 0.0, %v365
    %367 = vdwg.mxu0
    %vm368 = vcmask 261120
    %v370 = vsel %vm368, %v299, 0
    %v373 = vsel %vm368, %v302, 0
    %v376 = vsel %vm368, %v305, 0
    %v379 = vsel %vm368, %v308, 0
    %381 = vmatpush.msra.mxu0 0.0
    %382 = vmatpush.msra.mxu0 0.0
    %383 = vmatpush.msra.mxu0 0.0
    %384 = vmatpush.msra.mxu0 0.0
    %385 = vmatpush.msra.mxu0 0.0
    %386 = vmatpush.msra.mxu0 0.0
    %387 = vmatpush.msra.mxu0 0.0
    %388 = vmatpush.msra.mxu0 0.0
    %389 = vmatpush.msra.mxu0 0.0
    %390 = vmatpush.msra.mxu0 0.0
    %391 = vmatpush.msra.mxu0 0.0
    %392 = vmatpush.msra.mxu0 0.0
    %393 = vmatpush.msra.mxu0 %v313
    %394 = vmatpush.msra.mxu0 %v312
    %395 = vmatpush.msra.mxu0 %v311
    %396 = vmatpush.msra.mxu0 %v310
    %397 = vmatmul.f32.gmra.mxu0 %v370
    %v398 = vpop.f32.mrf.mxu0
    %v399 = vadd.f32 %v357, %v398
    %400 = vmatmul.f32.gmra.mxu0 %v373
    %v401 = vpop.f32.mrf.mxu0
    %v402 = vadd.f32 %v360, %v401
    %403 = vmatmul.f32.gmra.mxu0 %v376
    %v404 = vpop.f32.mrf.mxu0
    %v405 = vadd.f32 %v363, %v404
    %406 = vmatmul.f32.gmra.mxu0 %v379
    %v407 = vpop.f32.mrf.mxu0
    %v408 = vadd.f32 %v366, %v407
    %409 = vdwg.mxu0
    %v410 = vld [vmem:[#allocation7] sm:$0xff]
    %v411 = vld [vmem:[#allocation7 + $0x8] sm:$0xff]
    %v412 = vld [vmem:[#allocation7 + $0x10] sm:$0xff]
    %v413 = vld [vmem:[#allocation7 + $0x18] sm:$0xff]
    %v414 = vld [vmem:[#allocation8] sm:$0xff]
    %v415 = vld [vmem:[#allocation8 + $0x8] sm:$0xff]
    %v416 = vld [vmem:[#allocation8 + $0x10] sm:$0xff]
    %v417 = vld [vmem:[#allocation8 + $0x18] sm:$0xff]
    %v418 = vld [vmem:[#allocation10] sm:$0xff]
    %v419 = vld [vmem:[#allocation10 + $0x8] sm:$0x1]
    %v420 = vld [vmem:[%s8] sm:$0x1]
    %v421 = vld [vmem:[%s9] sm:$0x1]
    %v422 = vld [vmem:[#allocation11] sm:$0xff]
    %v423 = vld [vmem:[#allocation11 + $0x8] sm:$0xff]
    %v424 = vld [vmem:[#allocation11 + $0x10] sm:$0xff]
    %v425 = vld [vmem:[#allocation11 + $0x18] sm:$0xff]
    %v426 = vld [vmem:[#allocation11 + $0x20] sm:$0xff]
    %v427 = vld [vmem:[#allocation11 + $0x28] sm:$0xff]
    %v428 = vld [vmem:[#allocation11 + $0x30] sm:$0xff]
    %v429 = vld [vmem:[#allocation11 + $0x38] sm:$0xff]
    %v430 = vld [vmem:[#allocation11 + $0x40] sm:$0xff]
    %v431 = vld [vmem:[#allocation11 + $0x48] sm:$0xff]
    %v432 = vld [vmem:[#allocation11 + $0x50] sm:$0xff]
    %v433 = vld [vmem:[#allocation11 + $0x58] sm:$0xff]
    %v434 = vld [vmem:[#allocation11 + $0x60] sm:$0xff]
    %v435 = vld [vmem:[#allocation11 + $0x68] sm:$0xff]
    %v436 = vld [vmem:[#allocation11 + $0x70] sm:$0xff]
    %v437 = vld [vmem:[#allocation11 + $0x78] sm:$0xff]
    %v438 = vld [vmem:[#allocation13] sm:$0xff]
    %v439 = vld [vmem:[#allocation13 + $0x8] sm:$0xff]
    %v440 = vld [vmem:[#allocation13 + $0x10] sm:$0xff]
    %v441 = vld [vmem:[#allocation13 + $0x18] sm:$0xff]
    %v442 = vld [vmem:[#allocation13 + $0x20] sm:$0xff]
    %v443 = vld [vmem:[#allocation13 + $0x28] sm:$0xff]
    %v444 = vld [vmem:[#allocation13 + $0x30] sm:$0xff]
    %v445 = vld [vmem:[#allocation13 + $0x38] sm:$0xff]
    %v446 = vld [vmem:[#allocation13 + $0x40] sm:$0xff]
    %v447 = vld [vmem:[#allocation13 + $0x48] sm:$0xff]
    %v448 = vld [vmem:[#allocation13 + $0x50] sm:$0xff]
    %v449 = vld [vmem:[#allocation13 + $0x58] sm:$0xff]
    %v450 = vld [vmem:[#allocation13 + $0x60] sm:$0xff]
    %v451 = vld [vmem:[#allocation13 + $0x68] sm:$0xff]
    %v452 = vld [vmem:[#allocation13 + $0x70] sm:$0xff]
    %v453 = vld [vmem:[#allocation13 + $0x78] sm:$0xff]
    %v454 = vld [vmem:[%s12] sm:$0x1]
    %v455 = vld [vmem:[%s13] sm:$0x1]
    %v456 = vld [vmem:[#allocation14] sm:$0xff]
    %v457 = vld [vmem:[#allocation14 + $0x8] sm:$0xff]
    %v458 = vld [vmem:[#allocation14 + $0x10] sm:$0xff]
    %v459 = vld [vmem:[#allocation14 + $0x18] sm:$0xff]
    %v460 = vld [vmem:[#allocation14 + $0x20] sm:$0xff]
    %v461 = vld [vmem:[#allocation14 + $0x28] sm:$0xff]
    %v462 = vld [vmem:[#allocation14 + $0x30] sm:$0xff]
    %v463 = vld [vmem:[#allocation14 + $0x38] sm:$0xff]
    %v464 = vld [vmem:[#allocation14 + $0x40] sm:$0xff]
    %v465 = vld [vmem:[#allocation14 + $0x48] sm:$0xff]
    %v466 = vld [vmem:[#allocation14 + $0x50] sm:$0xff]
    %v467 = vld [vmem:[#allocation14 + $0x58] sm:$0xff]
    %v468 = vld [vmem:[#allocation14 + $0x60] sm:$0xff]
    %v469 = vld [vmem:[#allocation14 + $0x68] sm:$0xff]
    %v470 = vld [vmem:[#allocation14 + $0x70] sm:$0xff]
    %v471 = vld [vmem:[#allocation14 + $0x78] sm:$0xff]
    %472 = vrot.lane.b32.xlu0 %v399, 8
    %v473 = vpop.permute.xlu0 %472
    %474 = vrot.lane.b32.xlu0 %v402, 8
    %v475 = vpop.permute.xlu0 %474
    %476 = vrot.lane.b32.xlu0 %v405, 8
    %v477 = vpop.permute.xlu0 %476
    %478 = vrot.lane.b32.xlu0 %v408, 8
    %v479 = vpop.permute.xlu0 %478
    %480 = vrot.lane.b32.xlu0 %v399, 120
    %v481 = vpop.permute.xlu0 %480
    %482 = vrot.lane.b32.xlu0 %v402, 120
    %v483 = vpop.permute.xlu0 %482
    %484 = vrot.lane.b32.xlu0 %v405, 120
    %v485 = vpop.permute.xlu0 %484
    %486 = vrot.lane.b32.xlu0 %v408, 120
    %v487 = vpop.permute.xlu0 %486
    %v488 = vperm.slane %v418, 0
    %v489 = vmul.f32 %v473, %v488
    %v490 = vmul.f32 %v475, %v488
    %v491 = vmul.f32 %v477, %v488
    %v492 = vmul.f32 %v479, %v488
    %v493 = vperm.slane %v418, 1
    %v494 = vmul.f32 %v399, %v493
    %v495 = vmul.f32 %v402, %v493
    %v496 = vmul.f32 %v405, %v493
    %v497 = vmul.f32 %v408, %v493
    %v498 = vadd.f32 %v489, %v494
    %v499 = vadd.f32 %v490, %v495
    %v500 = vadd.f32 %v491, %v496
    %v501 = vadd.f32 %v492, %v497
    %v502 = vperm.slane %v418, 2
    %v503 = vmul.f32 %v481, %v502
    %v504 = vmul.f32 %v483, %v502
    %v505 = vmul.f32 %v485, %v502
    %v506 = vmul.f32 %v487, %v502
    %v507 = vadd.f32 %v498, %v503
    %v508 = vadd.f32 %v499, %v504
    %v509 = vadd.f32 %v500, %v505
    %v510 = vadd.f32 %v501, %v506
    %v511 = vperm.slane %v418, 3
    %v512 = vmul.f32 %v473, %v511
    %v513 = vmul.f32 %v475, %v511
    %v514 = vmul.f32 %v477, %v511
    %v515 = vmul.f32 %v479, %v511
    %v516 = vperm.slane %v418, 4
    %v517 = vmul.f32 %v399, %v516
    %v518 = vmul.f32 %v402, %v516
    %v519 = vmul.f32 %v405, %v516
    %v520 = vmul.f32 %v408, %v516
    %v521 = vadd.f32 %v512, %v517
    %v522 = vadd.f32 %v513, %v518
    %v523 = vadd.f32 %v514, %v519
    %v524 = vadd.f32 %v515, %v520
    %v525 = vperm.slane %v418, 5
    %v526 = vmul.f32 %v481, %v525
    %v527 = vmul.f32 %v483, %v525
    %v528 = vmul.f32 %v485, %v525
    %v529 = vmul.f32 %v487, %v525
    %v530 = vadd.f32 %v521, %v526
    %v531 = vadd.f32 %v522, %v527
    %v532 = vadd.f32 %v523, %v528
    %v533 = vadd.f32 %v524, %v529
    %v535 = vsel %vm368, %v410, 0
    %v538 = vsel %vm368, %v411, 0
    %v541 = vsel %vm368, %v412, 0
    %v544 = vsel %vm368, %v413, 0
    %546 = vmatpush.msra.mxu0 0.0
    %547 = vmatpush.msra.mxu0 0.0
    %548 = vmatpush.msra.mxu0 0.0
    %549 = vmatpush.msra.mxu0 0.0
    %550 = vmatpush.msra.mxu0 0.0
    %551 = vmatpush.msra.mxu0 0.0
    %552 = vmatpush.msra.mxu0 0.0
    %553 = vmatpush.msra.mxu0 0.0
    %554 = vmatpush.msra.mxu0 0.0
    %555 = vmatpush.msra.mxu0 0.0
    %556 = vmatpush.msra.mxu0 0.0
    %557 = vmatpush.msra.mxu0 0.0
    %558 = vmatpush.msra.mxu0 %v510
    %559 = vmatpush.msra.mxu0 %v509
    %560 = vmatpush.msra.mxu0 %v508
    %561 = vmatpush.msra.mxu0 %v507
    %562 = vmatmul.f32.gmra.mxu0 %v535
    %v563 = vpop.f32.mrf.mxu0
    %v564 = vadd.f32 %v530, %v563
    %565 = vmatmul.f32.gmra.mxu0 %v538
    %v566 = vpop.f32.mrf.mxu0
    %v567 = vadd.f32 %v531, %v566
    %568 = vmatmul.f32.gmra.mxu0 %v541
    %v569 = vpop.f32.mrf.mxu0
    %v570 = vadd.f32 %v532, %v569
    %571 = vmatmul.f32.gmra.mxu0 %v544
    %v572 = vpop.f32.mrf.mxu0
    %v573 = vadd.f32 %v533, %v572
    %574 = vdwg.mxu0
    %v575 = vperm.slane %v418, 6
    %v576 = vmul.f32 %v473, %v575
    %v577 = vmul.f32 %v475, %v575
    %v578 = vmul.f32 %v477, %v575
    %v579 = vmul.f32 %v479, %v575
    %v580 = vperm.slane %v418, 7
    %v581 = vmul.f32 %v399, %v580
    %v582 = vmul.f32 %v402, %v580
    %v583 = vmul.f32 %v405, %v580
    %v584 = vmul.f32 %v408, %v580
    %v585 = vadd.f32 %v576, %v581
    %v586 = vadd.f32 %v577, %v582
    %v587 = vadd.f32 %v578, %v583
    %v588 = vadd.f32 %v579, %v584
    %v589 = vperm.slane %v419, 0
    %v590 = vmul.f32 %v481, %v589
    %v591 = vmul.f32 %v483, %v589
    %v592 = vmul.f32 %v485, %v589
    %v593 = vmul.f32 %v487, %v589
    %v594 = vadd.f32 %v585, %v590
    %v595 = vadd.f32 %v586, %v591
    %v596 = vadd.f32 %v587, %v592
    %v597 = vadd.f32 %v588, %v593
    %v599 = vsel %vm368, %v414, 0
    %v602 = vsel %vm368, %v415, 0
    %v605 = vsel %vm368, %v416, 0
    %v608 = vsel %vm368, %v417, 0
    %610 = vmatpush.msra.mxu0 0.0
    %611 = vmatpush.msra.mxu0 0.0
    %612 = vmatpush.msra.mxu0 0.0
    %613 = vmatpush.msra.mxu0 0.0
    %614 = vmatpush.msra.mxu0 0.0
    %615 = vmatpush.msra.mxu0 0.0
    %616 = vmatpush.msra.mxu0 0.0
    %617 = vmatpush.msra.mxu0 0.0
    %618 = vmatpush.msra.mxu0 0.0
    %619 = vmatpush.msra.mxu0 0.0
    %620 = vmatpush.msra.mxu0 0.0
    %621 = vmatpush.msra.mxu0 0.0
    %622 = vmatpush.msra.mxu0 %v597
    %623 = vmatpush.msra.mxu0 %v596
    %624 = vmatpush.msra.mxu0 %v595
    %625 = vmatpush.msra.mxu0 %v594
    %626 = vmatmul.f32.gmra.mxu0 %v599
    %v627 = vpop.f32.mrf.mxu0
    %v628 = vadd.f32 0.0, %v627
    %629 = vmatmul.f32.gmra.mxu0 %v602
    %v630 = vpop.f32.mrf.mxu0
    %v631 = vadd.f32 0.0, %v630
    %632 = vmatmul.f32.gmra.mxu0 %v605
    %v633 = vpop.f32.mrf.mxu0
    %v634 = vadd.f32 0.0, %v633
    %635 = vmatmul.f32.gmra.mxu0 %v608
    %v636 = vpop.f32.mrf.mxu0
    %v637 = vadd.f32 0.0, %v636
    %638 = vdwg.mxu0
    %v639 = vadd.f32 %v564, %v628
    %v640 = vadd.f32 %v567, %v631
    %v641 = vadd.f32 %v570, %v634
    %v642 = vadd.f32 %v573, %v637
    %v643 = vadd.f32 %v639, %v640
    %v644 = vadd.f32 %v643, %v641
    %v645 = vadd.f32 %v644, %v642
    %v646 = vrot.slane %v645, 4
    %v647 = vadd.f32 %v645, %v646
    %v648 = vrot.slane %v647, 2
    %v649 = vadd.f32 %v647, %v648
    %v650 = vrot.slane %v649, 1
    %v651 = vadd.f32 %v649, %v650
    %v652 = vmul.f32 %v639, %v639
    %v653 = vmul.f32 %v640, %v640
    %v654 = vmul.f32 %v641, %v641
    %v655 = vmul.f32 %v642, %v642
    %v656 = vadd.f32 %v652, %v653
    %v657 = vadd.f32 %v656, %v654
    %v658 = vadd.f32 %v657, %v655
    %v659 = vrot.slane %v658, 4
    %v660 = vadd.f32 %v658, %v659
    %v661 = vrot.slane %v660, 2
    %v662 = vadd.f32 %v660, %v661
    %v663 = vrot.slane %v662, 1
    %v664 = vadd.f32 %v662, %v663
    %665 = vmatpush.msra.mxu0 %v437
    %666 = vmatpush.msra.mxu0 %v436
    %667 = vmatpush.msra.mxu0 %v435
    %668 = vmatpush.msra.mxu0 %v434
    %669 = vmatpush.msra.mxu0 %v433
    %670 = vmatpush.msra.mxu0 %v432
    %671 = vmatpush.msra.mxu0 %v431
    %672 = vmatpush.msra.mxu0 %v430
    %673 = vmatpush.msra.mxu0 %v429
    %674 = vmatpush.msra.mxu0 %v428
    %675 = vmatpush.msra.mxu0 %v427
    %676 = vmatpush.msra.mxu0 %v426
    %677 = vmatpush.msra.mxu0 %v425
    %678 = vmatpush.msra.mxu0 %v424
    %679 = vmatpush.msra.mxu0 %v423
    %680 = vmatpush.msra.mxu0 %v422
    %681 = vmatmul.f32.gmra.mxu0 %v651
    %v682 = vpop.f32.mrf.mxu0
    %v683 = vadd.f32 0.0, %v682
    %684 = vdwg.mxu0
    %685 = vmatpush.msra.mxu0 %v437
    %686 = vmatpush.msra.mxu0 %v436
    %687 = vmatpush.msra.mxu0 %v435
    %688 = vmatpush.msra.mxu0 %v434
    %689 = vmatpush.msra.mxu0 %v433
    %690 = vmatpush.msra.mxu0 %v432
    %691 = vmatpush.msra.mxu0 %v431
    %692 = vmatpush.msra.mxu0 %v430
    %693 = vmatpush.msra.mxu0 %v429
    %694 = vmatpush.msra.mxu0 %v428
    %695 = vmatpush.msra.mxu0 %v427
    %696 = vmatpush.msra.mxu0 %v426
    %697 = vmatpush.msra.mxu0 %v425
    %698 = vmatpush.msra.mxu0 %v424
    %699 = vmatpush.msra.mxu0 %v423
    %700 = vmatpush.msra.mxu0 %v422
    %701 = vmatmul.f32.gmra.mxu0 %v664
    %v702 = vpop.f32.mrf.mxu0
    %v703 = vadd.f32 0.0, %v702
    %704 = vdwg.mxu0
    %v705 = vmul.f32 %v683, %v683
    %v706 = vsub.f32 %v703, %v705
    %v707 = vmax.f32 %v706, 0.0
    %v708 = vadd.f32 %v707, 1e-05
    %v709 = vrsqrt.pop %v708
    %v710 = vmul.f32 %v709, %v708
    %v711 = vmul.f32 %v710, %v709
    %v712 = vmul.f32 0.5, %v711
    %v713 = vsub.f32 1.5, %v712
    %v714 = vmul.f32 %v709, %v713
    %vm715 = vweird.f32 %v708
    %vm716 = vweird.f32 %v709
    %vm717 = vmor %vm715, %vm716
    %v718 = vsel %vm717, %v709, %v714
    %v719 = vmul.f32 %v420, %v718
    %v721 = vperm.slane %v719, 0
    %v723 = vmul.f32 %v639, %v721
    %v724 = vmul.f32 %v640, %v721
    %v725 = vmul.f32 %v641, %v721
    %v726 = vmul.f32 %v642, %v721
    %v727 = vmul.f32 %v683, %v719
    %v728 = vsub.f32 %v421, %v727
    %v730 = vperm.slane %v728, 0
    %v732 = vadd.f32 %v723, %v730
    %v733 = vadd.f32 %v724, %v730
    %v734 = vadd.f32 %v725, %v730
    %v735 = vadd.f32 %v726, %v730
    %v736 = vmax.f32 %v732, 0.0
    %v737 = vmax.f32 %v733, 0.0
    %v738 = vmax.f32 %v734, 0.0
    %v739 = vmax.f32 %v735, 0.0
    %740 = vmatpush.msra.mxu0 %v453
    %741 = vmatpush.msra.mxu0 %v452
    %742 = vmatpush.msra.mxu0 %v451
    %743 = vmatpush.msra.mxu0 %v450
    %744 = vmatpush.msra.mxu0 %v449
    %745 = vmatpush.msra.mxu0 %v448
    %746 = vmatpush.msra.mxu0 %v447
    %747 = vmatpush.msra.mxu0 %v446
    %748 = vmatpush.msra.mxu0 %v445
    %749 = vmatpush.msra.mxu0 %v444
    %750 = vmatpush.msra.mxu0 %v443
    %751 = vmatpush.msra.mxu0 %v442
    %752 = vmatpush.msra.mxu0 %v441
    %753 = vmatpush.msra.mxu0 %v440
    %754 = vmatpush.msra.mxu0 %v439
    %755 = vmatpush.msra.mxu0 %v438
    %756 = vmatmul.f32.gmra.mxu0 %v736
    %v757 = vpop.f32.mrf.mxu0
    %v758 = vadd.f32 0.0, %v757
    %759 = vmatmul.f32.gmra.mxu0 %v737
    %v760 = vpop.f32.mrf.mxu0
    %v761 = vadd.f32 0.0, %v760
    %762 = vmatmul.f32.gmra.mxu0 %v738
    %v763 = vpop.f32.mrf.mxu0
    %v764 = vadd.f32 0.0, %v763
    %765 = vmatmul.f32.gmra.mxu0 %v739
    %v766 = vpop.f32.mrf.mxu0
    %v767 = vadd.f32 0.0, %v766
    %768 = vdwg.mxu0
    %v769 = vadd.f32 %v758, %v761
    %v770 = vadd.f32 %v769, %v764
    %v771 = vadd.f32 %v770, %v767
    %v772 = vrot.slane %v771, 4
    %v773 = vadd.f32 %v771, %v772
    %v774 = vrot.slane %v773, 2
    %v775 = vadd.f32 %v773, %v774
    %v776 = vrot.slane %v775, 1
    %v777 = vadd.f32 %v775, %v776
    %v778 = vmul.f32 %v758, %v758
    %v779 = vmul.f32 %v761, %v761
    %v780 = vmul.f32 %v764, %v764
    %v781 = vmul.f32 %v767, %v767
    %v782 = vadd.f32 %v778, %v779
    %v783 = vadd.f32 %v782, %v780
    %v784 = vadd.f32 %v783, %v781
    %v785 = vrot.slane %v784, 4
    %v786 = vadd.f32 %v784, %v785
    %v787 = vrot.slane %v786, 2
    %v788 = vadd.f32 %v786, %v787
    %v789 = vrot.slane %v788, 1
    %v790 = vadd.f32 %v788, %v789
    %791 = vmatpush.msra.mxu0 %v471
    %792 = vmatpush.msra.mxu0 %v470
    %793 = vmatpush.msra.mxu0 %v469
    %794 = vmatpush.msra.mxu0 %v468
    %795 = vmatpush.msra.mxu0 %v467
    %796 = vmatpush.msra.mxu0 %v466
    %797 = vmatpush.msra.mxu0 %v465
    %798 = vmatpush.msra.mxu0 %v464
    %799 = vmatpush.msra.mxu0 %v463
    %800 = vmatpush.msra.mxu0 %v462
    %801 = vmatpush.msra.mxu0 %v461
    %802 = vmatpush.msra.mxu0 %v460
    %803 = vmatpush.msra.mxu0 %v459
    %804 = vmatpush.msra.mxu0 %v458
    %805 = vmatpush.msra.mxu0 %v457
    %806 = vmatpush.msra.mxu0 %v456
    %807 = vmatmul.f32.gmra.mxu0 %v777
    %v808 = vpop.f32.mrf.mxu0
    %v809 = vadd.f32 0.0, %v808
    %810 = vdwg.mxu0
    %811 = vmatpush.msra.mxu0 %v471
    %812 = vmatpush.msra.mxu0 %v470
    %813 = vmatpush.msra.mxu0 %v469
    %814 = vmatpush.msra.mxu0 %v468
    %815 = vmatpush.msra.mxu0 %v467
    %816 = vmatpush.msra.mxu0 %v466
    %817 = vmatpush.msra.mxu0 %v465
    %818 = vmatpush.msra.mxu0 %v464
    %819 = vmatpush.msra.mxu0 %v463
    %820 = vmatpush.msra.mxu0 %v462
    %821 = vmatpush.msra.mxu0 %v461
    %822 = vmatpush.msra.mxu0 %v460
    %823 = vmatpush.msra.mxu0 %v459
    %824 = vmatpush.msra.mxu0 %v458
    %825 = vmatpush.msra.mxu0 %v457
    %826 = vmatpush.msra.mxu0 %v456
    %827 = vmatmul.f32.gmra.mxu0 %v790
    %v828 = vpop.f32.mrf.mxu0
    %v829 = vadd.f32 0.0, %v828
    %830 = vdwg.mxu0
    %v831 = vmul.f32 %v809, %v809
    %v832 = vsub.f32 %v829, %v831
    %v833 = vmax.f32 %v832, 0.0
    %v834 = vadd.f32 %v833, 1e-05
    %v835 = vrsqrt.pop %v834
    %v836 = vmul.f32 %v835, %v834
    %v837 = vmul.f32 %v836, %v835
    %v838 = vmul.f32 0.5, %v837
    %v839 = vsub.f32 1.5, %v838
    %v840 = vmul.f32 %v835, %v839
    %vm841 = vweird.f32 %v834
    %vm842 = vweird.f32 %v835
    %vm843 = vmor %vm841, %vm842
    %v844 = vsel %vm843, %v835, %v840
    %v845 = vmul.f32 %v454, %v844
    %v847 = vperm.slane %v845, 0
    %v849 = vmul.f32 %v758, %v847
    %v850 = vmul.f32 %v761, %v847
    %v851 = vmul.f32 %v764, %v847
    %v852 = vmul.f32 %v767, %v847
    %v853 = vmul.f32 %v809, %v845
    %v854 = vsub.f32 %v455, %v853
    %v856 = vperm.slane %v854, 0
    %v858 = vadd.f32 %v849, %v856
    %v859 = vadd.f32 %v850, %v856
    %v860 = vadd.f32 %v851, %v856
    %v861 = vadd.f32 %v852, %v856
    %v862 = vmax.f32 %v858, 0.0
    %v863 = vmax.f32 %v859, 0.0
    %v864 = vmax.f32 %v860, 0.0
    %v865 = vmax.f32 %v861, 0.0
    %v866 = vld [vmem:[#allocation16] sm:$0xff]
    %v867 = vld [vmem:[#allocation16 + $0x8] sm:$0x1]
    %v868 = vld [vmem:[%s16] sm:$0x1]
    %v869 = vld [vmem:[%s17] sm:$0x1]
    %v870 = vld [vmem:[#allocation17] sm:$0xff]
    %v871 = vld [vmem:[#allocation17 + $0x8] sm:$0xff]
    %v872 = vld [vmem:[#allocation17 + $0x10] sm:$0xff]
    %v873 = vld [vmem:[#allocation17 + $0x18] sm:$0xff]
    %v874 = vld [vmem:[#allocation17 + $0x20] sm:$0xff]
    %v875 = vld [vmem:[#allocation17 + $0x28] sm:$0xff]
    %v876 = vld [vmem:[#allocation17 + $0x30] sm:$0xff]
    %v877 = vld [vmem:[#allocation17 + $0x38] sm:$0xff]
    %v878 = vld [vmem:[#allocation17 + $0x40] sm:$0xff]
    %v879 = vld [vmem:[#allocation17 + $0x48] sm:$0xff]
    %v880 = vld [vmem:[#allocation17 + $0x50] sm:$0xff]
    %v881 = vld [vmem:[#allocation17 + $0x58] sm:$0xff]
    %v882 = vld [vmem:[#allocation17 + $0x60] sm:$0xff]
    %v883 = vld [vmem:[#allocation17 + $0x68] sm:$0xff]
    %v884 = vld [vmem:[#allocation17 + $0x70] sm:$0xff]
    %v885 = vld [vmem:[#allocation17 + $0x78] sm:$0xff]
    %v886 = vld [vmem:[#allocation19] sm:$0xff]
    %v887 = vld [vmem:[#allocation19 + $0x8] sm:$0xff]
    %v888 = vld [vmem:[#allocation19 + $0x10] sm:$0xff]
    %v889 = vld [vmem:[#allocation19 + $0x18] sm:$0xff]
    %v890 = vld [vmem:[#allocation19 + $0x20] sm:$0xff]
    %v891 = vld [vmem:[#allocation19 + $0x28] sm:$0xff]
    %v892 = vld [vmem:[#allocation19 + $0x30] sm:$0xff]
    %v893 = vld [vmem:[#allocation19 + $0x38] sm:$0xff]
    %v894 = vld [vmem:[#allocation19 + $0x40] sm:$0xff]
    %v895 = vld [vmem:[#allocation19 + $0x48] sm:$0xff]
    %v896 = vld [vmem:[#allocation19 + $0x50] sm:$0xff]
    %v897 = vld [vmem:[#allocation19 + $0x58] sm:$0xff]
    %v898 = vld [vmem:[#allocation19 + $0x60] sm:$0xff]
    %v899 = vld [vmem:[#allocation19 + $0x68] sm:$0xff]
    %v900 = vld [vmem:[#allocation19 + $0x70] sm:$0xff]
    %v901 = vld [vmem:[#allocation19 + $0x78] sm:$0xff]
    %v902 = vld [vmem:[#allocation19 + $0x80] sm:$0xff]
    %v903 = vld [vmem:[#allocation19 + $0x88] sm:$0xff]
    %v904 = vld [vmem:[#allocation19 + $0x90] sm:$0xff]
    %v905 = vld [vmem:[#allocation19 + $0x98] sm:$0xff]
    %v906 = vld [vmem:[#allocation19 + $0xa0] sm:$0xff]
    %v907 = vld [vmem:[#allocation19 + $0xa8] sm:$0xff]
    %v908 = vld [vmem:[#allocation19 + $0xb0] sm:$0xff]
    %v909 = vld [vmem:[#allocation19 + $0xb8] sm:$0xff]
    %v910 = vld [vmem:[#allocation19 + $0xc0] sm:$0xff]
    %v911 = vld [vmem:[#allocation19 + $0xc8] sm:$0xff]
    %v912 = vld [vmem:[#allocation19 + $0xd0] sm:$0xff]
    %v913 = vld [vmem:[#allocation19 + $0xd8] sm:$0xff]
    %v914 = vld [vmem:[#allocation19 + $0xe0] sm:$0xff]
    %v915 = vld [vmem:[#allocation19 + $0xe8] sm:$0xff]
    %v916 = vld [vmem:[#allocation19 + $0xf0] sm:$0xff]
    %v917 = vld [vmem:[#allocation19 + $0xf8] sm:$0xff]
    %v918 = vld [vmem:[%s20] sm:$0x3]
    %v919 = vld [vmem:[%s21] sm:$0x3]
    %v920 = vld [vmem:[#allocation20] sm:$0xff]
    %v921 = vld [vmem:[#allocation20 + $0x8] sm:$0xff]
    %v922 = vld [vmem:[#allocation20 + $0x10] sm:$0xff]
    %v923 = vld [vmem:[#allocation20 + $0x18] sm:$0xff]
    %v924 = vld [vmem:[#allocation20 + $0x20] sm:$0xff]
    %v925 = vld [vmem:[#allocation20 + $0x28] sm:$0xff]
    %v926 = vld [vmem:[#allocation20 + $0x30] sm:$0xff]
    %v927 = vld [vmem:[#allocation20 + $0x38] sm:$0xff]
    %v928 = vld [vmem:[#allocation20 + $0x40] sm:$0xff]
    %v929 = vld [vmem:[#allocation20 + $0x48] sm:$0xff]
    %v930 = vld [vmem:[#allocation20 + $0x50] sm:$0xff]
    %v931 = vld [vmem:[#allocation20 + $0x58] sm:$0xff]
    %v932 = vld [vmem:[#allocation20 + $0x60] sm:$0xff]
    %v933 = vld [vmem:[#allocation20 + $0x68] sm:$0xff]
    %v934 = vld [vmem:[#allocation20 + $0x70] sm:$0xff]
    %v935 = vld [vmem:[#allocation20 + $0x78] sm:$0xff]
    %v936 = vld [vmem:[#allocation20 + $0x80] sm:$0xff]
    %v937 = vld [vmem:[#allocation20 + $0x88] sm:$0xff]
    %v938 = vld [vmem:[#allocation20 + $0x90] sm:$0xff]
    %v939 = vld [vmem:[#allocation20 + $0x98] sm:$0xff]
    %v940 = vld [vmem:[#allocation20 + $0xa0] sm:$0xff]
    %v941 = vld [vmem:[#allocation20 + $0xa8] sm:$0xff]
    %v942 = vld [vmem:[#allocation20 + $0xb0] sm:$0xff]
    %v943 = vld [vmem:[#allocation20 + $0xb8] sm:$0xff]
    %v944 = vld [vmem:[#allocation20 + $0xc0] sm:$0xff]
    %v945 = vld [vmem:[#allocation20 + $0xc8] sm:$0xff]
    %v946 = vld [vmem:[#allocation20 + $0xd0] sm:$0xff]
    %v947 = vld [vmem:[#allocation20 + $0xd8] sm:$0xff]
    %v948 = vld [vmem:[#allocation20 + $0xe0] sm:$0xff]
    %v949 = vld [vmem:[#allocation20 + $0xe8] sm:$0xff]
    %v950 = vld [vmem:[#allocation20 + $0xf0] sm:$0xff]
    %v951 = vld [vmem:[#allocation20 + $0xf8] sm:$0xff]
    %v952 = vld [vmem:[#allocation20 + $0x100] sm:$0xff]
    %v953 = vld [vmem:[#allocation20 + $0x108] sm:$0xff]
    %v954 = vld [vmem:[#allocation20 + $0x110] sm:$0xff]
    %v955 = vld [vmem:[#allocation20 + $0x118] sm:$0xff]
    %v956 = vld [vmem:[#allocation20 + $0x120] sm:$0xff]
    %v957 = vld [vmem:[#allocation20 + $0x128] sm:$0xff]
    %v958 = vld [vmem:[#allocation20 + $0x130] sm:$0xff]
    %v959 = vld [vmem:[#allocation20 + $0x138] sm:$0xff]
    %v960 = vld [vmem:[#allocation20 + $0x140] sm:$0xff]
    %v961 = vld [vmem:[#allocation20 + $0x148] sm:$0xff]
    %v962 = vld [vmem:[#allocation20 + $0x150] sm:$0xff]
    %v963 = vld [vmem:[#allocation20 + $0x158] sm:$0xff]
    %v964 = vld [vmem:[#allocation20 + $0x160] sm:$0xff]
    %v965 = vld [vmem:[#allocation20 + $0x168] sm:$0xff]
    %v966 = vld [vmem:[#allocation20 + $0x170] sm:$0xff]
    %v967 = vld [vmem:[#allocation20 + $0x178] sm:$0xff]
    %v968 = vld [vmem:[#allocation20 + $0x180] sm:$0xff]
    %v969 = vld [vmem:[#allocation20 + $0x188] sm:$0xff]
    %v970 = vld [vmem:[#allocation20 + $0x190] sm:$0xff]
    %v971 = vld [vmem:[#allocation20 + $0x198] sm:$0xff]
    %v972 = vld [vmem:[#allocation20 + $0x1a0] sm:$0xff]
    %v973 = vld [vmem:[#allocation20 + $0x1a8] sm:$0xff]
    %v974 = vld [vmem:[#allocation20 + $0x1b0] sm:$0xff]
    %v975 = vld [vmem:[#allocation20 + $0x1b8] sm:$0xff]
    %v976 = vld [vmem:[#allocation20 + $0x1c0] sm:$0xff]
    %v977 = vld [vmem:[#allocation20 + $0x1c8] sm:$0xff]
    %v978 = vld [vmem:[#allocation20 + $0x1d0] sm:$0xff]
    %v979 = vld [vmem:[#allocation20 + $0x1d8] sm:$0xff]
    %v980 = vld [vmem:[#allocation20 + $0x1e0] sm:$0xff]
    %v981 = vld [vmem:[#allocation20 + $0x1e8] sm:$0xff]
    %v982 = vld [vmem:[#allocation20 + $0x1f0] sm:$0xff]
    %v983 = vld [vmem:[#allocation20 + $0x1f8] sm:$0xff]
    %984 = vrot.lane.b32.xlu0 %v862, 8
    %v985 = vpop.permute.xlu0 %984
    %986 = vrot.lane.b32.xlu0 %v863, 8
    %v987 = vpop.permute.xlu0 %986
    %988 = vrot.lane.b32.xlu0 %v864, 8
    %v989 = vpop.permute.xlu0 %988
    %990 = vrot.lane.b32.xlu0 %v865, 8
    %v991 = vpop.permute.xlu0 %990
    %992 = vrot.lane.b32.xlu0 %v862, 120
    %v993 = vpop.permute.xlu0 %992
    %994 = vrot.lane.b32.xlu0 %v863, 120
    %v995 = vpop.permute.xlu0 %994
    %996 = vrot.lane.b32.xlu0 %v864, 120
    %v997 = vpop.permute.xlu0 %996
    %998 = vrot.lane.b32.xlu0 %v865, 120
    %v999 = vpop.permute.xlu0 %998
    %v1000 = vperm.slane %v866, 0
    %v1001 = vmul.f32 %v985, %v1000
    %v1002 = vmul.f32 %v987, %v1000
    %v1003 = vmul.f32 %v989, %v1000
    %v1004 = vmul.f32 %v991, %v1000
    %v1005 = vperm.slane %v866, 1
    %v1006 = vmul.f32 %v862, %v1005
    %v1007 = vmul.f32 %v863, %v1005
    %v1008 = vmul.f32 %v864, %v1005
    %v1009 = vmul.f32 %v865, %v1005
    %v1010 = vadd.f32 %v1001, %v1006
    %v1011 = vadd.f32 %v1002, %v1007
    %v1012 = vadd.f32 %v1003, %v1008
    %v1013 = vadd.f32 %v1004, %v1009
    %v1014 = vperm.slane %v866, 2
    %v1015 = vmul.f32 %v993, %v1014
    %v1016 = vmul.f32 %v995, %v1014
    %v1017 = vmul.f32 %v997, %v1014
    %v1018 = vmul.f32 %v999, %v1014
    %v1019 = vadd.f32 %v1010, %v1015
    %v1020 = vadd.f32 %v1011, %v1016
    %v1021 = vadd.f32 %v1012, %v1017
    %v1022 = vadd.f32 %v1013, %v1018
    %v1023 = vperm.slane %v866, 3
    %v1024 = vmul.f32 %v985, %v1023
    %v1025 = vmul.f32 %v987, %v1023
    %v1026 = vmul.f32 %v989, %v1023
    %v1027 = vmul.f32 %v991, %v1023
    %v1028 = vperm.slane %v866, 4
    %v1029 = vmul.f32 %v862, %v1028
    %v1030 = vmul.f32 %v863, %v1028
    %v1031 = vmul.f32 %v864, %v1028
    %v1032 = vmul.f32 %v865, %v1028
    %v1033 = vadd.f32 %v1024, %v1029
    %v1034 = vadd.f32 %v1025, %v1030
    %v1035 = vadd.f32 %v1026, %v1031
    %v1036 = vadd.f32 %v1027, %v1032
    %v1037 = vperm.slane %v866, 5
    %v1038 = vmul.f32 %v993, %v1037
    %v1039 = vmul.f32 %v995, %v1037
    %v1040 = vmul.f32 %v997, %v1037
    %v1041 = vmul.f32 %v999, %v1037
    %v1042 = vadd.f32 %v1033, %v1038
    %v1043 = vadd.f32 %v1034, %v1039
    %v1044 = vadd.f32 %v1035, %v1040
    %v1045 = vadd.f32 %v1036, %v1041
    %1046 = vmatpush.msra.mxu0 0.0
    %1047 = vmatpush.msra.mxu0 0.0
    %1048 = vmatpush.msra.mxu0 0.0
    %1049 = vmatpush.msra.mxu0 0.0
    %1050 = vmatpush.msra.mxu0 0.0
    %1051 = vmatpush.msra.mxu0 0.0
    %1052 = vmatpush.msra.mxu0 0.0
    %1053 = vmatpush.msra.mxu0 0.0
    %1054 = vmatpush.msra.mxu0 0.0
    %1055 = vmatpush.msra.mxu0 0.0
    %1056 = vmatpush.msra.mxu0 0.0
    %1057 = vmatpush.msra.mxu0 0.0
    %1058 = vmatpush.msra.mxu0 %v1022
    %1059 = vmatpush.msra.mxu0 %v1021
    %1060 = vmatpush.msra.mxu0 %v1020
    %1061 = vmatpush.msra.mxu0 %v1019
    %1062 = vmatmul.f32.gmra.mxu0 %v535
    %v1063 = vpop.f32.mrf.mxu0
    %v1064 = vadd.f32 %v1042, %v1063
    %1065 = vmatmul.f32.gmra.mxu0 %v538
    %v1066 = vpop.f32.mrf.mxu0
    %v1067 = vadd.f32 %v1043, %v1066
    %1068 = vmatmul.f32.gmra.mxu0 %v541
    %v1069 = vpop.f32.mrf.mxu0
    %v1070 = vadd.f32 %v1044, %v1069
    %1071 = vmatmul.f32.gmra.mxu0 %v544
    %v1072 = vpop.f32.mrf.mxu0
    %v1073 = vadd.f32 %v1045, %v1072
    %1074 = vdwg.mxu0
    %v1075 = vperm.slane %v866, 6
    %v1076 = vmul.f32 %v985, %v1075
    %v1077 = vmul.f32 %v987, %v1075
    %v1078 = vmul.f32 %v989, %v1075
    %v1079 = vmul.f32 %v991, %v1075
    %v1080 = vperm.slane %v866, 7
    %v1081 = vmul.f32 %v862, %v1080
    %v1082 = vmul.f32 %v863, %v1080
    %v1083 = vmul.f32 %v864, %v1080
    %v1084 = vmul.f32 %v865, %v1080
    %v1085 = vadd.f32 %v1076, %v1081
    %v1086 = vadd.f32 %v1077, %v1082
    %v1087 = vadd.f32 %v1078, %v1083
    %v1088 = vadd.f32 %v1079, %v1084
    %v1089 = vperm.slane %v867, 0
    %v1090 = vmul.f32 %v993, %v1089
    %v1091 = vmul.f32 %v995, %v1089
    %v1092 = vmul.f32 %v997, %v1089
    %v1093 = vmul.f32 %v999, %v1089
    %v1094 = vadd.f32 %v1085, %v1090
    %v1095 = vadd.f32 %v1086, %v1091
    %v1096 = vadd.f32 %v1087, %v1092
    %v1097 = vadd.f32 %v1088, %v1093
    %1098 = vmatpush.msra.mxu0 0.0
    %1099 = vmatpush.msra.mxu0 0.0
    %1100 = vmatpush.msra.mxu0 0.0
    %1101 = vmatpush.msra.mxu0 0.0
    %1102 = vmatpush.msra.mxu0 0.0
    %1103 = vmatpush.msra.mxu0 0.0
    %1104 = vmatpush.msra.mxu0 0.0
    %1105 = vmatpush.msra.mxu0 0.0
    %1106 = vmatpush.msra.mxu0 0.0
    %1107 = vmatpush.msra.mxu0 0.0
    %1108 = vmatpush.msra.mxu0 0.0
    %1109 = vmatpush.msra.mxu0 0.0
    %1110 = vmatpush.msra.mxu0 %v1097
    %1111 = vmatpush.msra.mxu0 %v1096
    %1112 = vmatpush.msra.mxu0 %v1095
    %1113 = vmatpush.msra.mxu0 %v1094
    %1114 = vmatmul.f32.gmra.mxu0 %v599
    %v1115 = vpop.f32.mrf.mxu0
    %v1116 = vadd.f32 0.0, %v1115
    %1117 = vmatmul.f32.gmra.mxu0 %v602
    %v1118 = vpop.f32.mrf.mxu0
    %v1119 = vadd.f32 0.0, %v1118
    %1120 = vmatmul.f32.gmra.mxu0 %v605
    %v1121 = vpop.f32.mrf.mxu0
    %v1122 = vadd.f32 0.0, %v1121
    %1123 = vmatmul.f32.gmra.mxu0 %v608
    %v1124 = vpop.f32.mrf.mxu0
    %v1125 = vadd.f32 0.0, %v1124
    %1126 = vdwg.mxu0
    %v1127 = vadd.f32 %v1064, %v1116
    %v1128 = vadd.f32 %v1067, %v1119
    %v1129 = vadd.f32 %v1070, %v1122
    %v1130 = vadd.f32 %v1073, %v1125
    %v1131 = vadd.f32 %v1127, %v1128
    %v1132 = vadd.f32 %v1131, %v1129
    %v1133 = vadd.f32 %v1132, %v1130
    %v1134 = vrot.slane %v1133, 4
    %v1135 = vadd.f32 %v1133, %v1134
    %v1136 = vrot.slane %v1135, 2
    %v1137 = vadd.f32 %v1135, %v1136
    %v1138 = vrot.slane %v1137, 1
    %v1139 = vadd.f32 %v1137, %v1138
    %v1140 = vmul.f32 %v1127, %v1127
    %v1141 = vmul.f32 %v1128, %v1128
    %v1142 = vmul.f32 %v1129, %v1129
    %v1143 = vmul.f32 %v1130, %v1130
    %v1144 = vadd.f32 %v1140, %v1141
    %v1145 = vadd.f32 %v1144, %v1142
    %v1146 = vadd.f32 %v1145, %v1143
    %v1147 = vrot.slane %v1146, 4
    %v1148 = vadd.f32 %v1146, %v1147
    %v1149 = vrot.slane %v1148, 2
    %v1150 = vadd.f32 %v1148, %v1149
    %v1151 = vrot.slane %v1150, 1
    %v1152 = vadd.f32 %v1150, %v1151
    %1153 = vmatpush.msra.mxu0 %v885
    %1154 = vmatpush.msra.mxu0 %v884
    %1155 = vmatpush.msra.mxu0 %v883
    %1156 = vmatpush.msra.mxu0 %v882
    %1157 = vmatpush.msra.mxu0 %v881
    %1158 = vmatpush.msra.mxu0 %v880
    %1159 = vmatpush.msra.mxu0 %v879
    %1160 = vmatpush.msra.mxu0 %v878
    %1161 = vmatpush.msra.mxu0 %v877
    %1162 = vmatpush.msra.mxu0 %v876
    %1163 = vmatpush.msra.mxu0 %v875
    %1164 = vmatpush.msra.mxu0 %v874
    %1165 = vmatpush.msra.mxu0 %v873
    %1166 = vmatpush.msra.mxu0 %v872
    %1167 = vmatpush.msra.mxu0 %v871
    %1168 = vmatpush.msra.mxu0 %v870
    %1169 = vmatmul.f32.gmra.mxu0 %v1139
    %v1170 = vpop.f32.mrf.mxu0
    %v1171 = vadd.f32 0.0, %v1170
    %1172 = vdwg.mxu0
    %1173 = vmatpush.msra.mxu0 %v885
    %1174 = vmatpush.msra.mxu0 %v884
    %1175 = vmatpush.msra.mxu0 %v883
    %1176 = vmatpush.msra.mxu0 %v882
    %1177 = vmatpush.msra.mxu0 %v881
    %1178 = vmatpush.msra.mxu0 %v880
    %1179 = vmatpush.msra.mxu0 %v879
    %1180 = vmatpush.msra.mxu0 %v878
    %1181 = vmatpush.msra.mxu0 %v877
    %1182 = vmatpush.msra.mxu0 %v876
    %1183 = vmatpush.msra.mxu0 %v875
    %1184 = vmatpush.msra.mxu0 %v874
    %1185 = vmatpush.msra.mxu0 %v873
    %1186 = vmatpush.msra.mxu0 %v872
    %1187 = vmatpush.msra.mxu0 %v871
    %1188 = vmatpush.msra.mxu0 %v870
    %1189 = vmatmul.f32.gmra.mxu0 %v1152
    %v1190 = vpop.f32.mrf.mxu0
    %v1191 = vadd.f32 0.0, %v1190
    %1192 = vdwg.mxu0
    %v1193 = vmul.f32 %v1171, %v1171
    %v1194 = vsub.f32 %v1191, %v1193
    %v1195 = vmax.f32 %v1194, 0.0
    %v1196 = vadd.f32 %v1195, 1e-05
    %v1197 = vrsqrt.pop %v1196
    %v1198 = vmul.f32 %v1197, %v1196
    %v1199 = vmul.f32 %v1198, %v1197
    %v1200 = vmul.f32 0.5, %v1199
    %v1201 = vsub.f32 1.5, %v1200
    %v1202 = vmul.f32 %v1197, %v1201
    %vm1203 = vweird.f32 %v1196
    %vm1204 = vweird.f32 %v1197
    %vm1205 = vmor %vm1203, %vm1204
    %v1206 = vsel %vm1205, %v1197, %v1202
    %v1207 = vmul.f32 %v868, %v1206
    %v1209 = vperm.slane %v1207, 0
    %v1211 = vmul.f32 %v1127, %v1209
    %v1212 = vmul.f32 %v1128, %v1209
    %v1213 = vmul.f32 %v1129, %v1209
    %v1214 = vmul.f32 %v1130, %v1209
    %v1215 = vmul.f32 %v1171, %v1207
    %v1216 = vsub.f32 %v869, %v1215
    %v1218 = vperm.slane %v1216, 0
    %v1220 = vadd.f32 %v1211, %v1218
    %v1221 = vadd.f32 %v1212, %v1218
    %v1222 = vadd.f32 %v1213, %v1218
    %v1223 = vadd.f32 %v1214, %v1218
    %v1224 = vmax.f32 %v1220, 0.0
    %v1225 = vmax.f32 %v1221, 0.0
    %v1226 = vmax.f32 %v1222, 0.0
    %v1227 = vmax.f32 %v1223, 0.0
    %1228 = vmatpush.msra.mxu0 %v916
    %1229 = vmatpush.msra.mxu0 %v914
    %1230 = vmatpush.msra.mxu0 %v912
    %1231 = vmatpush.msra.mxu0 %v910
    %1232 = vmatpush.msra.mxu0 %v908
    %1233 = vmatpush.msra.mxu0 %v906
    %1234 = vmatpush.msra.mxu0 %v904
    %1235 = vmatpush.msra.mxu0 %v902
    %1236 = vmatpush.msra.mxu0 %v900
    %1237 = vmatpush.msra.mxu0 %v898
    %1238 = vmatpush.msra.mxu0 %v896
    %1239 = vmatpush.msra.mxu0 %v894
    %1240 = vmatpush.msra.mxu0 %v892
    %1241 = vmatpush.msra.mxu0 %v890
    %1242 = vmatpush.msra.mxu0 %v888
    %1243 = vmatpush.msra.mxu0 %v886
    %1244 = vmatmul.f32.gmra.mxu0 %v1224
    %v1245 = vpop.f32.mrf.mxu0
    %v1246 = vadd.f32 0.0, %v1245
    %1247 = vmatmul.f32.gmra.mxu0 %v1225
    %v1248 = vpop.f32.mrf.mxu0
    %v1249 = vadd.f32 0.0, %v1248
    %1250 = vmatmul.f32.gmra.mxu0 %v1226
    %v1251 = vpop.f32.mrf.mxu0
    %v1252 = vadd.f32 0.0, %v1251
    %1253 = vmatmul.f32.gmra.mxu0 %v1227
    %v1254 = vpop.f32.mrf.mxu0
    %v1255 = vadd.f32 0.0, %v1254
    %1256 = vdwg.mxu0
    %1257 = vmatpush.msra.mxu0 %v917
    %1258 = vmatpush.msra.mxu0 %v915
    %1259 = vmatpush.msra.mxu0 %v913
    %1260 = vmatpush.msra.mxu0 %v911
    %1261 = vmatpush.msra.mxu0 %v909
    %1262 = vmatpush.msra.mxu0 %v907
    %1263 = vmatpush.msra.mxu0 %v905
    %1264 = vmatpush.msra.mxu0 %v903
    %1265 = vmatpush.msra.mxu0 %v901
    %1266 = vmatpush.msra.mxu0 %v899
    %1267 = vmatpush.msra.mxu0 %v897
    %1268 = vmatpush.msra.mxu0 %v895
    %1269 = vmatpush.msra.mxu0 %v893
    %1270 = vmatpush.msra.mxu0 %v891
    %1271 = vmatpush.msra.mxu0 %v889
    %1272 = vmatpush.msra.mxu0 %v887
    %1273 = vmatmul.f32.gmra.mxu0 %v1224
    %v1274 = vpop.f32.mrf.mxu0
    %v1275 = vadd.f32 0.0, %v1274
    %1276 = vmatmul.f32.gmra.mxu0 %v1225
    %v1277 = vpop.f32.mrf.mxu0
    %v1278 = vadd.f32 0.0, %v1277
    %1279 = vmatmul.f32.gmra.mxu0 %v1226
    %v1280 = vpop.f32.mrf.mxu0
    %v1281 = vadd.f32 0.0, %v1280
    %1282 = vmatmul.f32.gmra.mxu0 %v1227
    %v1283 = vpop.f32.mrf.mxu0
    %v1284 = vadd.f32 0.0, %v1283
    %1285 = vdwg.mxu0
    %v1286 = vadd.f32 %v1246, %v1249
    %v1287 = vadd.f32 %v1286, %v1252
    %v1288 = vadd.f32 %v1287, %v1255
    %v1289 = vrot.slane %v1288, 4
    %v1290 = vadd.f32 %v1288, %v1289
    %v1291 = vrot.slane %v1290, 2
    %v1292 = vadd.f32 %v1290, %v1291
    %v1293 = vrot.slane %v1292, 1
    %v1294 = vadd.f32 %v1292, %v1293
    %v1295 = vadd.f32 %v1275, %v1278
    %v1296 = vadd.f32 %v1295, %v1281
    %v1297 = vadd.f32 %v1296, %v1284
    %v1298 = vrot.slane %v1297, 4
    %v1299 = vadd.f32 %v1297, %v1298
    %v1300 = vrot.slane %v1299, 2
    %v1301 = vadd.f32 %v1299, %v1300
    %v1302 = vrot.slane %v1301, 1
    %v1303 = vadd.f32 %v1301, %v1302
    %v1304 = vmul.f32 %v1246, %v1246
    %v1305 = vmul.f32 %v1275, %v1275
    %v1306 = vmul.f32 %v1249, %v1249
    %v1307 = vmul.f32 %v1278, %v1278
    %v1308 = vmul.f32 %v1252, %v1252
    %v1309 = vmul.f32 %v1281, %v1281
    %v1310 = vmul.f32 %v1255, %v1255
    %v1311 = vmul.f32 %v1284, %v1284
    %v1312 = vadd.f32 %v1304, %v1306
    %v1313 = vadd.f32 %v1312, %v1308
    %v1314 = vadd.f32 %v1313, %v1310
    %v1315 = vrot.slane %v1314, 4
    %v1316 = vadd.f32 %v1314, %v1315
    %v1317 = vrot.slane %v1316, 2
    %v1318 = vadd.f32 %v1316, %v1317
    %v1319 = vrot.slane %v1318, 1
    %v1320 = vadd.f32 %v1318, %v1319
    %v1321 = vadd.f32 %v1305, %v1307
    %v1322 = vadd.f32 %v1321, %v1309
    %v1323 = vadd.f32 %v1322, %v1311
    %v1324 = vrot.slane %v1323, 4
    %v1325 = vadd.f32 %v1323, %v1324
    %v1326 = vrot.slane %v1325, 2
    %v1327 = vadd.f32 %v1325, %v1326
    %v1328 = vrot.slane %v1327, 1
    %v1329 = vadd.f32 %v1327, %v1328
    %1330 = vmatpush.msra.mxu0 %v950
    %1331 = vmatpush.msra.mxu0 %v948
    %1332 = vmatpush.msra.mxu0 %v946
    %1333 = vmatpush.msra.mxu0 %v944
    %1334 = vmatpush.msra.mxu0 %v942
    %1335 = vmatpush.msra.mxu0 %v940
    %1336 = vmatpush.msra.mxu0 %v938
    %1337 = vmatpush.msra.mxu0 %v936
    %1338 = vmatpush.msra.mxu0 %v934
    %1339 = vmatpush.msra.mxu0 %v932
    %1340 = vmatpush.msra.mxu0 %v930
    %1341 = vmatpush.msra.mxu0 %v928
    %1342 = vmatpush.msra.mxu0 %v926
    %1343 = vmatpush.msra.mxu0 %v924
    %1344 = vmatpush.msra.mxu0 %v922
    %1345 = vmatpush.msra.mxu0 %v920
    %1346 = vmatmul.f32.gmra.mxu0 %v1294
    %v1347 = vpop.f32.mrf.mxu0
    %v1348 = vadd.f32 0.0, %v1347
    %1349 = vdwg.mxu0
    %1350 = vmatpush.msra.mxu0 %v982
    %1351 = vmatpush.msra.mxu0 %v980
    %1352 = vmatpush.msra.mxu0 %v978
    %1353 = vmatpush.msra.mxu0 %v976
    %1354 = vmatpush.msra.mxu0 %v974
    %1355 = vmatpush.msra.mxu0 %v972
    %1356 = vmatpush.msra.mxu0 %v970
    %1357 = vmatpush.msra.mxu0 %v968
    %1358 = vmatpush.msra.mxu0 %v966
    %1359 = vmatpush.msra.mxu0 %v964
    %1360 = vmatpush.msra.mxu0 %v962
    %1361 = vmatpush.msra.mxu0 %v960
    %1362 = vmatpush.msra.mxu0 %v958
    %1363 = vmatpush.msra.mxu0 %v956
    %1364 = vmatpush.msra.mxu0 %v954
    %1365 = vmatpush.msra.mxu0 %v952
    %1366 = vmatmul.f32.gmra.mxu0 %v1303
    %v1367 = vpop.f32.mrf.mxu0
    %v1368 = vadd.f32 %v1348, %v1367
    %1369 = vdwg.mxu0
    %1370 = vmatpush.msra.mxu0 %v951
    %1371 = vmatpush.msra.mxu0 %v949
    %1372 = vmatpush.msra.mxu0 %v947
    %1373 = vmatpush.msra.mxu0 %v945
    %1374 = vmatpush.msra.mxu0 %v943
    %1375 = vmatpush.msra.mxu0 %v941
    %1376 = vmatpush.msra.mxu0 %v939
    %1377 = vmatpush.msra.mxu0 %v937
    %1378 = vmatpush.msra.mxu0 %v935
    %1379 = vmatpush.msra.mxu0 %v933
    %1380 = vmatpush.msra.mxu0 %v931
    %1381 = vmatpush.msra.mxu0 %v929
    %1382 = vmatpush.msra.mxu0 %v927
    %1383 = vmatpush.msra.mxu0 %v925
    %1384 = vmatpush.msra.mxu0 %v923
    %1385 = vmatpush.msra.mxu0 %v921
    %1386 = vmatmul.f32.gmra.mxu0 %v1294
    %v1387 = vpop.f32.mrf.mxu0
    %v1388 = vadd.f32 0.0, %v1387
    %1389 = vdwg.mxu0
    %1390 = vmatpush.msra.mxu0 %v983
    %1391 = vmatpush.msra.mxu0 %v981
    %1392 = vmatpush.msra.mxu0 %v979
    %1393 = vmatpush.msra.mxu0 %v977
    %1394 = vmatpush.msra.mxu0 %v975
    %1395 = vmatpush.msra.mxu0 %v973
    %1396 = vmatpush.msra.mxu0 %v971
    %1397 = vmatpush.msra.mxu0 %v969
    %1398 = vmatpush.msra.mxu0 %v967
    %1399 = vmatpush.msra.mxu0 %v965
    %1400 = vmatpush.msra.mxu0 %v963
    %1401 = vmatpush.msra.mxu0 %v961
    %1402 = vmatpush.msra.mxu0 %v959
    %1403 = vmatpush.msra.mxu0 %v957
    %1404 = vmatpush.msra.mxu0 %v955
    %1405 = vmatpush.msra.mxu0 %v953
    %1406 = vmatmul.f32.gmra.mxu0 %v1303
    %v1407 = vpop.f32.mrf.mxu0
    %v1408 = vadd.f32 %v1388, %v1407
    %1409 = vdwg.mxu0
    %1410 = vmatpush.msra.mxu0 %v950
    %1411 = vmatpush.msra.mxu0 %v948
    %1412 = vmatpush.msra.mxu0 %v946
    %1413 = vmatpush.msra.mxu0 %v944
    %1414 = vmatpush.msra.mxu0 %v942
    %1415 = vmatpush.msra.mxu0 %v940
    %1416 = vmatpush.msra.mxu0 %v938
    %1417 = vmatpush.msra.mxu0 %v936
    %1418 = vmatpush.msra.mxu0 %v934
    %1419 = vmatpush.msra.mxu0 %v932
    %1420 = vmatpush.msra.mxu0 %v930
    %1421 = vmatpush.msra.mxu0 %v928
    %1422 = vmatpush.msra.mxu0 %v926
    %1423 = vmatpush.msra.mxu0 %v924
    %1424 = vmatpush.msra.mxu0 %v922
    %1425 = vmatpush.msra.mxu0 %v920
    %1426 = vmatmul.f32.gmra.mxu0 %v1320
    %v1427 = vpop.f32.mrf.mxu0
    %v1428 = vadd.f32 0.0, %v1427
    %1429 = vdwg.mxu0
    %1430 = vmatpush.msra.mxu0 %v982
    %1431 = vmatpush.msra.mxu0 %v980
    %1432 = vmatpush.msra.mxu0 %v978
    %1433 = vmatpush.msra.mxu0 %v976
    %1434 = vmatpush.msra.mxu0 %v974
    %1435 = vmatpush.msra.mxu0 %v972
    %1436 = vmatpush.msra.mxu0 %v970
    %1437 = vmatpush.msra.mxu0 %v968
    %1438 = vmatpush.msra.mxu0 %v966
    %1439 = vmatpush.msra.mxu0 %v964
    %1440 = vmatpush.msra.mxu0 %v962
    %1441 = vmatpush.msra.mxu0 %v960
    %1442 = vmatpush.msra.mxu0 %v958
    %1443 = vmatpush.msra.mxu0 %v956
    %1444 = vmatpush.msra.mxu0 %v954
    %1445 = vmatpush.msra.mxu0 %v952
    %1446 = vmatmul.f32.gmra.mxu0 %v1329
    %v1447 = vpop.f32.mrf.mxu0
    %v1448 = vadd.f32 %v1428, %v1447
    %1449 = vdwg.mxu0
    %1450 = vmatpush.msra.mxu0 %v951
    %1451 = vmatpush.msra.mxu0 %v949
    %1452 = vmatpush.msra.mxu0 %v947
    %1453 = vmatpush.msra.mxu0 %v945
    %1454 = vmatpush.msra.mxu0 %v943
    %1455 = vmatpush.msra.mxu0 %v941
    %1456 = vmatpush.msra.mxu0 %v939
    %1457 = vmatpush.msra.mxu0 %v937
    %1458 = vmatpush.msra.mxu0 %v935
    %1459 = vmatpush.msra.mxu0 %v933
    %1460 = vmatpush.msra.mxu0 %v931
    %1461 = vmatpush.msra.mxu0 %v929
    %1462 = vmatpush.msra.mxu0 %v927
    %1463 = vmatpush.msra.mxu0 %v925
    %1464 = vmatpush.msra.mxu0 %v923
    %1465 = vmatpush.msra.mxu0 %v921
    %1466 = vmatmul.f32.gmra.mxu0 %v1320
    %v1467 = vpop.f32.mrf.mxu0
    %v1468 = vadd.f32 0.0, %v1467
    %1469 = vdwg.mxu0
    %1470 = vmatpush.msra.mxu0 %v983
    %1471 = vmatpush.msra.mxu0 %v981
    %1472 = vmatpush.msra.mxu0 %v979
    %1473 = vmatpush.msra.mxu0 %v977
    %1474 = vmatpush.msra.mxu0 %v975
    %1475 = vmatpush.msra.mxu0 %v973
    %1476 = vmatpush.msra.mxu0 %v971
    %1477 = vmatpush.msra.mxu0 %v969
    %1478 = vmatpush.msra.mxu0 %v967
    %1479 = vmatpush.msra.mxu0 %v965
    %1480 = vmatpush.msra.mxu0 %v963
    %1481 = vmatpush.msra.mxu0 %v961
    %1482 = vmatpush.msra.mxu0 %v959
    %1483 = vmatpush.msra.mxu0 %v957
    %1484 = vmatpush.msra.mxu0 %v955
    %1485 = vmatpush.msra.mxu0 %v953
    %1486 = vmatmul.f32.gmra.mxu0 %v1329
    %v1487 = vpop.f32.mrf.mxu0
    %v1488 = vadd.f32 %v1468, %v1487
    %1489 = vdwg.mxu0
    %v1490 = vmul.f32 %v1368, %v1368
    %v1491 = vmul.f32 %v1408, %v1408
    %v1492 = vsub.f32 %v1448, %v1490
    %v1493 = vsub.f32 %v1488, %v1491
    %v1494 = vmax.f32 %v1492, 0.0
    %v1495 = vmax.f32 %v1493, 0.0
    %v1496 = vadd.f32 %v1494, 1e-05
    %v1497 = vadd.f32 %v1495, 1e-05
    %v1498 = vrsqrt.pop %v1496
    %v1499 = vmul.f32 %v1498, %v1496
    %v1500 = vmul.f32 %v1499, %v1498
    %v1501 = vmul.f32 0.5, %v1500
    %v1502 = vsub.f32 1.5, %v1501
    %v1503 = vmul.f32 %v1498, %v1502
    %vm1504 = vweird.f32 %v1496
    %vm1505 = vweird.f32 %v1498
    %vm1506 = vmor %vm1504, %vm1505
    %v1507 = vsel %vm1506, %v1498, %v1503
    %v1508 = vrsqrt.pop %v1497
    %v1509 = vmul.f32 %v1508, %v1497
    %v1510 = vmul.f32 %v1509, %v1508
    %v1511 = vmul.f32 0.5, %v1510
    %v1512 = vsub.f32 1.5, %v1511
    %v1513 = vmul.f32 %v1508, %v1512
    %vm1514 = vweird.f32 %v1497
    %vm1515 = vweird.f32 %v1508
    %vm1516 = vmor %vm1514, %vm1515
    %v1517 = vsel %vm1516, %v1508, %v1513
    %v1520 = vrot.slane %v1517, 7
    %vm1521 = vcmask 1040384
    %v1522 = vsel %vm1521, %v1507, %v1520
    %v1524 = vmul.f32 %v918, %v1522
    %v1526 = vperm.slane %v1524, 0
    %v1527 = vperm.slane %v1524, 1
    %v1530 = vmul.f32 %v1246, %v1526
    %v1531 = vmul.f32 %v1275, %v1527
    %v1532 = vmul.f32 %v1249, %v1526
    %v1533 = vmul.f32 %v1278, %v1527
    %v1534 = vmul.f32 %v1252, %v1526
    %v1535 = vmul.f32 %v1281, %v1527
    %v1536 = vmul.f32 %v1255, %v1526
    %v1537 = vmul.f32 %v1284, %v1527
    %v1538 = vmul.f32 %v1368, %v1526
    %v1539 = vmul.f32 %v1408, %v1527
    %v1542 = vrot.slane %v1539, 7
    %v1543 = vsel %vm1521, %v1538, %v1542
    %v1545 = vsub.f32 %v919, %v1543
    %v1547 = vperm.slane %v1545, 0
    %v1548 = vperm.slane %v1545, 1
    %v1551 = vadd.f32 %v1530, %v1547
    %v1552 = vadd.f32 %v1531, %v1548
    %v1553 = vadd.f32 %v1532, %v1547
    %v1554 = vadd.f32 %v1533, %v1548
    %v1555 = vadd.f32 %v1534, %v1547
    %v1556 = vadd.f32 %v1535, %v1548
    %v1557 = vadd.f32 %v1536, %v1547
    %v1558 = vadd.f32 %v1537, %v1548
    %v1559 = vmax.f32 %v1551, 0.0
    %v1560 = vmax.f32 %v1552, 0.0
    %v1561 = vmax.f32 %v1553, 0.0
    %v1562 = vmax.f32 %v1554, 0.0
    %v1563 = vmax.f32 %v1555, 0.0
    %v1564 = vmax.f32 %v1556, 0.0
    %v1565 = vmax.f32 %v1557, 0.0
    %v1566 = vmax.f32 %v1558, 0.0
    %1567 = vst [vmem:[#allocation22] sm:$0xff] %v1559
    %1568 = vst [vmem:[#allocation22 + $0x8] sm:$0xff] %v1560
    %1569 = vst [vmem:[#allocation22 + $0x10] sm:$0xff] %v1561
    %1570 = vst [vmem:[#allocation22 + $0x18] sm:$0xff] %v1562
    %1571 = vst [vmem:[#allocation22 + $0x20] sm:$0xff] %v1563
    %1572 = vst [vmem:[#allocation22 + $0x28] sm:$0xff] %v1564
    %1573 = vst [vmem:[#allocation22 + $0x30] sm:$0xff] %v1565
    %1574 = vst [vmem:[#allocation22 + $0x38] sm:$0xff] %v1566
    // Predicated region
    $region142: #{tpu_custom_call.1} parent=1 // pred_check
      _
    $region143: #{tpu_custom_call.1} parent=1 // pred_check_branch
      %1576 = sbr.rel (0) target = $region145
    $region144: #{tpu_custom_call.1} parent=1 // pred_region
      %1578 = vsyncadd [#allocation4], 0
      %s1579 = sshll.u32 [#allocation22], 4
      %s1580 = int_to_ptr.vmem [resolvable:$true] %s1579
      %s1581 = sshll.u32 %s23, 4
      %s1582 = int_to_ptr.hbm [resolvable:$true] %s1581
      %1587 = dma.vmem_to_hbm [thread:$0]  %s1580, 1024, %s1582, [#allocation4], 256, 256, 16
    $region145: #{tpu_custom_call.1} parent=1 // pred_fallthru
      _
    // Predicated region
    $region146: #{tpu_custom_call.1} parent=1 // pred_check
      _
    $region147: #{tpu_custom_call.1} parent=1 // pred_check_branch
      %1589 = sbr.rel (0) target = $region149
    $region148: #{tpu_custom_call.1} parent=1 // pred_region
      %1591 = dma.done [#allocation4], 1024
    $region149: #{tpu_custom_call.1} parent=1 // pred_fallthru
      _
    %1592 = vsyncpa [#allocation3], 1
    %1593 = vsyncpa [#allocation6], 1
    %1594 = vsyncpa [#allocation9], 1
    %1595 = vsyncpa [#allocation12], 1
    %1596 = vsyncpa [#allocation15], 1
    %1597 = vsyncpa [#allocation18], 1
    %1598 = vsyncpa [#allocation21], 1
    %1599 = vsyncpa [#allocation4], 1

</llo_original>
